<compile_context>
chip_gen: v7x
topology: tpu7x:2x2x1
jax: 0.10.0
libtpu: 0.0.40
codegen_flags: <defaults>
</compile_context>

<pallas_src>
import jax
import jax.numpy as jnp
from jax.experimental import pallas as pl
from jax.experimental.pallas import tpu as pltpu


# ---------------------------------------------------------------------------
# Helpers
# ---------------------------------------------------------------------------
def _pick_tile(n, max_tile, align):
    """Largest multiple of `align` dividing n, capped at max_tile.
    Falls back to the full dimension (single block) if none exists."""
    if n <= max_tile:
        return n
    t = (max_tile // align) * align
    while t >= align:
        if n % t == 0:
            return t
        t -= align
    return n


def _guarded_rsqrt(s):
    # torch: rowsum^(-1/2) with infs zeroed.  Guarding on s > 0 also keeps the
    # pathological rowsum(A+I) < 0 case finite (covers the inf and NaN paths).
    return jnp.where(s > 0.0, jax.lax.rsqrt(s), 0.0)


# ---------------------------------------------------------------------------
# Fused single-pass kernel: whole matrix resident in VMEM (small/medium N)
# ---------------------------------------------------------------------------
def _normalize_fused_kernel(a_ref, out_ref):
    n = a_ref.shape[0]
    rows = jax.lax.broadcasted_iota(jnp.int32, (n, n), 0)
    cols = jax.lax.broadcasted_iota(jnp.int32, (n, n), 1)
    a = a_ref[...] + jnp.where(rows == cols, 1.0, 0.0).astype(a_ref.dtype)

    # Row sums, sublane-oriented (n, 1): plain per-row reduce.
    s_col = jnp.sum(a, axis=1, keepdims=True)
    r_col = _guarded_rsqrt(s_col)                       # row scale   r_inv[i]

    # Row sums, lane-oriented (1, n): one tiny MXU mat-vec contracting over
    # A's column axis (== ones @ A^T), which avoids any in-kernel
    # (n,1)->(1,n) relayout/transpose.  Cost is ~n^2 MACs — free filler for a
    # memory-bound kernel.
    ones = jnp.ones((8, n), jnp.float32)
    s_row = jax.lax.dot_general(
        ones, a, (((1,), (1,)), ((), ())),
        preferred_element_type=jnp.float32)[0:1, :]
    r_row = _guarded_rsqrt(s_row)                       # column scale r_inv[j]

    out_ref[...] = (r_col * a * r_row).astype(out_ref.dtype)


def _normalize_fused(adj):
    n = adj.shape[0]
    return pl.pallas_call(
        _normalize_fused_kernel,
        out_shape=jax.ShapeDtypeStruct((n, n), jnp.float32),
        in_specs=[pl.BlockSpec(memory_space=pltpu.MemorySpace.VMEM)],
        out_specs=pl.BlockSpec(memory_space=pltpu.MemorySpace.VMEM),
        compiler_params=pltpu.CompilerParams(vmem_limit_bytes=48 << 20),
    )(adj)


# ---------------------------------------------------------------------------
# Two-pass tiled fallback (large N)
# Pass 1: r_inv[i] = (rowsum(A)[i] + 1)^(-1/2), guarded to 0 when <= 0
# ---------------------------------------------------------------------------
def _rinv_kernel(a_ref, rinv_ref):
    k = pl.program_id(1)

    @pl.when(k == 0)
    def _():
        rinv_ref[...] = jnp.zeros_like(rinv_ref)

    # Partial row sum of this (TM, TK) block; the accumulator lives in the
    # resident output block across the reduction axis.
    rinv_ref[...] += jnp.sum(a_ref[...], axis=1, keepdims=True)

    @pl.when(k == pl.num_programs(1) - 1)
    def _():
        s = rinv_ref[...] + 1.0  # the +I adds exactly 1 to every row sum
        rinv_ref[...] = _guarded_rsqrt(s)


def _rinv_call(adj, *, tm, tk):
    n = adj.shape[0]
    return pl.pallas_call(
        _rinv_kernel,
        out_shape=jax.ShapeDtypeStruct((n, 1), jnp.float32),
        grid_spec=pltpu.PrefetchScalarGridSpec(
            num_scalar_prefetch=0,
            grid=(n // tm, n // tk),
            in_specs=[pl.BlockSpec((tm, tk), lambda i, k: (i, k))],
            out_specs=pl.BlockSpec((tm, 1), lambda i, k: (i, 0)),
        ),
        compiler_params=pltpu.CompilerParams(
            dimension_semantics=("parallel", "arbitrary")),
    )(adj)


# ---------------------------------------------------------------------------
# Pass 2: out[i,j] = r_inv[i] * (A[i,j] + [i == j]) * r_inv[j]
# ---------------------------------------------------------------------------
def _scale_kernel(a_ref, rrow_ref, rcol_ref, out_ref):
    tm, tn = a_ref.shape
    bi = pl.program_id(0)
    bj = pl.program_id(1)
    rows = jax.lax.broadcasted_iota(jnp.int32, (tm, tn), 0) + bi * tm
    cols = jax.lax.broadcasted_iota(jnp.int32, (tm, tn), 1) + bj * tn
    a = a_ref[...] + jnp.where(rows == cols, 1.0, 0.0).astype(a_ref.dtype)
    # Two VPU broadcast multiplies replace the two MXU matmuls of the
    # reference (r_mat_inv @ a @ r_mat_inv with diagonal r_mat_inv).
    out_ref[...] = (rrow_ref[...] * a * rcol_ref[...]).astype(out_ref.dtype)


def _scale_call(adj, r_inv_col, r_inv_row, *, tm, tn):
    n = adj.shape[0]
    return pl.pallas_call(
        _scale_kernel,
        out_shape=jax.ShapeDtypeStruct((n, n), jnp.float32),
        grid_spec=pltpu.PrefetchScalarGridSpec(
            num_scalar_prefetch=0,
            grid=(n // tm, n // tn),
            in_specs=[
                pl.BlockSpec((tm, tn), lambda i, j: (i, j)),  # A block
                pl.BlockSpec((tm, 1), lambda i, j: (i, 0)),   # row scale
                pl.BlockSpec((1, tn), lambda i, j: (0, j)),   # column scale
            ],
            out_specs=pl.BlockSpec((tm, tn), lambda i, j: (i, j)),
        ),
        compiler_params=pltpu.CompilerParams(
            dimension_semantics=("parallel", "parallel")),
    )(adj, r_inv_col, r_inv_row)


# ---------------------------------------------------------------------------
# Dispatcher
# ---------------------------------------------------------------------------
_FUSED_MAX_N = 1024  # whole-matrix-in-VMEM path; ~24 MiB worst case at 1024


def normalize_adj(adj, symmetric=False, force_two_pass=False):
    adj = jnp.asarray(adj, jnp.float32)
    if symmetric:
        # Upstream Pro-GNN symmetrizes the learned parameter before
        # normalizing; done once in plain JAX (cheap transpose + add).
        adj = 0.5 * (adj + adj.T)
    n = adj.shape[0]
    if (not force_two_pass) and n <= _FUSED_MAX_N and n % 128 == 0:
        return _normalize_fused(adj)
    # Tiled two-pass fallback: sublane-aligned rows, lane-dense columns.
    tm = _pick_tile(n, 256, 8)
    tk = _pick_tile(n, 1024, 128)
    tn = _pick_tile(n, 1024, 128)
    r_inv = _rinv_call(adj, tm=tm, tk=tk)           # (n, 1) column scale
    r_inv_row = r_inv.reshape(1, n)                 # (1, n) for the columns
    return _scale_call(adj, r_inv, r_inv_row, tm=tm, tn=tn)


# ---------------------------------------------------------------------------
# Module wrapper
# ---------------------------------------------------------------------------
class EstimateAdjPallas:
    """JAX/Pallas port of EstimateAdj."""

    def __init__(self, adj, symmetric=False):
        # _init_estimation: parameter initialized as a copy of `adj`.
        self.estimated_adj = jnp.asarray(adj, dtype=jnp.float32)
        self.symmetric = symmetric

    def forward(self):
        # forward() returns the parameter itself; no copy kernel needed.
        return self.estimated_adj

    def __call__(self):
        return self.forward()

    def normalize(self):
        return normalize_adj(self.estimated_adj, symmetric=self.symmetric)


# ---------------------------------------------------------------------------
# Reference (pure JAX) for verification
# ---------------------------------------------------------------------------
def _normalize_ref(adj, symmetric=False):
    adj = jnp.asarray(adj, jnp.float32)
    if symmetric:
        adj = 0.5 * (adj + adj.T)
    n = adj.shape[0]
    a = adj + jnp.eye(n, dtype=adj.dtype)
    rowsum = a.sum(1)
    r_inv = jnp.where(rowsum > 0.0, jax.lax.rsqrt(rowsum), 0.0)
    # diag(r_inv) @ a @ diag(r_inv) == broadcast scaling (exact same math).
    return a * r_inv[:, None] * r_inv[None, :]


if __name__ == "__main__":
    key = jax.random.PRNGKey(0)
    k1, k2 = jax.random.split(key)

    # Case 1: N = 512 symmetric 0/1 adjacency -> fused single-kernel path.
    n1 = 512
    r = jax.random.uniform(k1, (n1, n1))
    adj1 = (r < 0.05).astype(jnp.float32)
    adj1 = jnp.maximum(adj1, adj1.T)
    adj1 = adj1 * (1.0 - jnp.eye(n1, dtype=jnp.float32))

    m1 = EstimateAdjPallas(adj1, symmetric=True)

    out_fwd = m1.forward()
    jax.block_until_ready(out_fwd)
    assert out_fwd.shape == (n1, n1) and out_fwd.dtype == jnp.float32
    assert jnp.allclose(out_fwd, m1.estimated_adj)

    out1 = m1.normalize()
    jax.block_until_ready(out1)
    ref1 = _normalize_ref(adj1, symmetric=True)
    # Slightly looser tolerance: in-kernel reduce / MXU mat-vec may order the
    # row-sum additions differently than the XLA reference.
    assert jnp.allclose(out1, ref1, atol=2e-5, rtol=2e-5), float(
        jnp.max(jnp.abs(out1 - ref1)))

    # Same input through the tiled two-pass fallback (the large-N path), so
    # both Pallas code paths are compiled and checked.
    out1_tp = normalize_adj(adj1, symmetric=True, force_two_pass=True)
    jax.block_until_ready(out1_tp)
    assert jnp.allclose(out1_tp, ref1, atol=1e-5, rtol=1e-5)

    # Case 2: N = 128, non-symmetric, degenerate rows exercising the
    # rowsum(A+I) <= 0 guard (inf and NaN paths of the original isinf logic).
    n2 = 128
    adj2 = jax.random.uniform(k2, (n2, n2))
    adj2 = adj2.at[3, :].set(0.0).at[3, 7].set(-1.0)   # rowsum(A+I) == 0
    adj2 = adj2.at[4, :].set(0.0).at[4, 9].set(-2.0)   # rowsum(A+I) < 0

    m2 = EstimateAdjPallas(adj2, symmetric=False)
    out2 = m2.normalize()
    jax.block_until_ready(out2)
    ref2 = _normalize_ref(adj2, symmetric=False)
    assert jnp.allclose(out2, ref2, atol=2e-5, rtol=2e-5)
    assert bool(jnp.all(jnp.isfinite(out2)))

    print("KERNEL_OK")
</pallas_src>

<mosaic_0001>
module attributes {stable_mosaic.version = 11 : i64} {
  func.func @_normalize_fused_kernel(%arg0: memref<512x512xf32, #tpu.memory_space<vmem>>, %arg1: memref<512x512xf32, #tpu.memory_space<vmem>>) attributes {dimension_semantics = [], scalar_prefetch = 0 : i64, scratch_operands = 0 : i64, tpu.core_type = #tpu.core_type<tc>} {
    %0 = tpu.iota {dimensions = array<i32: 0>} : vector<512x512xi32>
    %1 = tpu.iota {dimensions = array<i32: 1>} : vector<512x512xi32>
    %c0 = arith.constant 0 : index
    %c0_0 = arith.constant 0 : index
    %2 = vector.load %arg0[%c0, %c0_0] : memref<512x512xf32, #tpu.memory_space<vmem>>, vector<512x512xf32>
    %3 = arith.cmpi eq, %0, %1 : vector<512x512xi32>
    %cst = arith.constant 1.000000e+00 : f32
    %cst_1 = arith.constant 0.000000e+00 : f32
    %4 = vector.broadcast %cst : f32 to vector<512x512xf32>
    %5 = vector.broadcast %cst_1 : f32 to vector<512x512xf32>
    %6 = arith.select %3, %4, %5 : vector<512x512xi1>, vector<512x512xf32>
    %7 = arith.addf %2, %6 : vector<512x512xf32>
    %cst_2 = arith.constant dense<0.000000e+00> : vector<512xf32>
    %8 = vector.multi_reduction <add>, %7, %cst_2 [1] : vector<512x512xf32> to vector<512xf32>
    %9 = vector.shape_cast %8 : vector<512xf32> to vector<512x1xf32>
    %cst_3 = arith.constant 0.000000e+00 : f32
    %10 = vector.broadcast %cst_3 : f32 to vector<512x1xf32>
    %11 = arith.cmpf ogt, %9, %10 : vector<512x1xf32>
    %12 = math.rsqrt %9 : vector<512x1xf32>
    %cst_4 = arith.constant 0.000000e+00 : f32
    %13 = vector.broadcast %cst_4 : f32 to vector<512x1xf32>
    %14 = arith.select %11, %12, %13 : vector<512x1xi1>, vector<512x1xf32>
    %cst_5 = arith.constant 1.000000e+00 : f32
    %15 = vector.broadcast %cst_5 : f32 to vector<8x512xf32>
    %cst_6 = arith.constant dense<0.000000e+00> : vector<8x512xf32>
    %16 = tpu.matmul %15, %7, %cst_6 {dimension_numbers = #tpu.dot_dimension_numbers<[1], [1], [0], [0], [0, 0, 1, 0], [], []>} : vector<8x512xf32>, vector<512x512xf32>, vector<8x512xf32> -> vector<8x512xf32>
    %17 = vector.extract_strided_slice %16 {offsets = [0, 0], sizes = [1, 512], strides = [1, 1]} : vector<8x512xf32> to vector<1x512xf32>
    %cst_7 = arith.constant 0.000000e+00 : f32
    %18 = vector.broadcast %cst_7 : f32 to vector<1x512xf32>
    %19 = arith.cmpf ogt, %17, %18 : vector<1x512xf32>
    %20 = math.rsqrt %17 : vector<1x512xf32>
    %cst_8 = arith.constant 0.000000e+00 : f32
    %21 = vector.broadcast %cst_8 : f32 to vector<1x512xf32>
    %22 = arith.select %19, %20, %21 : vector<1x512xi1>, vector<1x512xf32>
    %23 = vector.broadcast %14 : vector<512x1xf32> to vector<512x512xf32>
    %24 = arith.mulf %23, %7 : vector<512x512xf32>
    %25 = vector.broadcast %22 : vector<1x512xf32> to vector<512x512xf32>
    %26 = arith.mulf %24, %25 : vector<512x512xf32>
    %c0_9 = arith.constant 0 : index
    %c0_10 = arith.constant 0 : index
    %27 = vector.load %arg1[%c0_9, %c0_10] : memref<512x512xf32, #tpu.memory_space<vmem>>, vector<512x512xf32>
    tpu.vector_store %arg1[%c0_9, %c0_10], %26 {strides = array<i32>} : memref<512x512xf32, #tpu.memory_space<vmem>>, vector<512x512xf32>,
    return
  }
}

</mosaic_0001>

<llo_original>
// kernel: tpu_custom_call.1
$region0: #{tpu_custom_call.1}
  #allocation0 [shape = 'u32[]', space=smem, size = 0x4, offset = 0x4, fixed_abs, tag = 'smem constant byte address 0x4 - core index']
  #allocation1 [shape = 'u32[144,128]{1,0:T(1,128)}', space=vmem, size = 0x12000, scoped, tag = 'internal scratch']
  %s0 = inlined_call_operand.hbm [shape: f32[512,512], index: 0, kind: input, shape index: {}]
  %s1 = inlined_call_operand.hbm [shape: f32[512,512], index: 1, kind: output, shape index: {}]
  %s2 = sld [smem:[#allocation0]]
  $region18: #{tpu_custom_call.1} parent=0
    _
  %s4 = ssub.s32 1, %s2
  %s5 = scalar_select 0, %s4, %s2
  $region1: #{tpu_custom_call.1} parent=0
    #allocation2 [shape = 'u8[1048576]{0}', space=vmem, size = 0x100000, scoped, tag = 'input window, operand 0, single buffered']
    #allocation3 [shape = 's32[1]{0}', space=sflag, size = 0x4, scoped, tag = 'scoped memory for tpu_custom_call.1']
    #allocation4 [shape = 's32[1]{0}', space=sflag, size = 0x4, scoped, tag = 'scoped memory for tpu_custom_call.1']
    #allocation5 [shape = 'u8[1048576]{0}', space=vmem, size = 0x100000, scoped, tag = 'output window, operand 0, single buffered']
    %6 = vsyncpa [#allocation3], 0
    %7 = vsyncpa [#allocation4], 0
    // Predicated region
    $region2: #{tpu_custom_call.1} parent=1 // pred_check
      _
    $region3: #{tpu_custom_call.1} parent=1 // pred_check_branch
      %9 = sbr.rel (0) target = $region5
    $region4: #{tpu_custom_call.1} parent=1 // pred_region
      %s11 = ssub.s32 32768, 32768
      %12 = vsyncadd [#allocation3], %s11
      %s13 = sshll.u32 [#allocation2], 4
      %s14 = int_to_ptr.vmem [resolvable:$true] %s13
      %19 = dma.hbm_to_vmem [thread:$0]  %s0, 32768, %s14, [#allocation3], 512, 512, 32
    $region5: #{tpu_custom_call.1} parent=1 // pred_fallthru
      _
    // Predicated region
    $region6: #{tpu_custom_call.1} parent=1 // pred_check
      _
    $region7: #{tpu_custom_call.1} parent=1 // pred_check_branch
      %21 = sbr.rel (0) target = $region9
    $region8: #{tpu_custom_call.1} parent=1 // pred_region
      %22 = dma.done [#allocation3], 32768
    $region9: #{tpu_custom_call.1} parent=1 // pred_fallthru
      _
    %v23 = vlaneseq
    %v24 = vshrl.u32 %v23, 7
    %v25 = vadd.s32 %v24, 8
    %v26 = vadd.s32 %v24, 16
    %v27 = vadd.s32 %v24, 24
    %v28 = vadd.s32 %v24, 32
    %v29 = vadd.s32 %v24, 40
    %v30 = vadd.s32 %v24, 48
    %v31 = vadd.s32 %v24, 56
    %v32 = vadd.s32 %v24, 64
    %v33 = vadd.s32 %v24, 72
    %v34 = vadd.s32 %v24, 80
    %v35 = vadd.s32 %v24, 88
    %v36 = vadd.s32 %v24, 96
    %v37 = vadd.s32 %v24, 104
    %v38 = vadd.s32 %v24, 112
    %v39 = vadd.s32 %v24, 120
    %v40 = vadd.s32 %v24, 128
    %v41 = vadd.s32 %v24, 136
    %v42 = vadd.s32 %v24, 144
    %v43 = vadd.s32 %v24, 152
    %v44 = vadd.s32 %v24, 160
    %v45 = vadd.s32 %v24, 168
    %v46 = vadd.s32 %v24, 176
    %v47 = vadd.s32 %v24, 184
    %v48 = vadd.s32 %v24, 192
    %v49 = vadd.s32 %v24, 200
    %v50 = vadd.s32 %v24, 208
    %v51 = vadd.s32 %v24, 216
    %v52 = vadd.s32 %v24, 224
    %v53 = vadd.s32 %v24, 232
    %v54 = vadd.s32 %v24, 240
    %v55 = vadd.s32 %v24, 248
    %v56 = vadd.s32 %v24, 256
    %v57 = vadd.s32 %v24, 264
    %v58 = vadd.s32 %v24, 272
    %v59 = vadd.s32 %v24, 280
    %v60 = vadd.s32 %v24, 288
    %v61 = vadd.s32 %v24, 296
    %v62 = vadd.s32 %v24, 304
    %v63 = vadd.s32 %v24, 312
    %v64 = vadd.s32 %v24, 320
    %v65 = vadd.s32 %v24, 328
    %v66 = vadd.s32 %v24, 336
    %v67 = vadd.s32 %v24, 344
    %v68 = vadd.s32 %v24, 352
    %v69 = vadd.s32 %v24, 360
    %v70 = vadd.s32 %v24, 368
    %v71 = vadd.s32 %v24, 376
    %v72 = vadd.s32 %v24, 384
    %v73 = vadd.s32 %v24, 392
    %v74 = vadd.s32 %v24, 400
    %v75 = vadd.s32 %v24, 408
    %v76 = vadd.s32 %v24, 416
    %v77 = vadd.s32 %v24, 424
    %v78 = vadd.s32 %v24, 432
    %v79 = vadd.s32 %v24, 440
    %v80 = vadd.s32 %v24, 448
    %v81 = vadd.s32 %v24, 456
    %v82 = vadd.s32 %v24, 464
    %v83 = vadd.s32 %v24, 472
    %v84 = vadd.s32 %v24, 480
    %v85 = vadd.s32 %v24, 488
    %v86 = vadd.s32 %v24, 496
    %v87 = vadd.s32 %v24, 504
    %v88 = vlaneseq
    %v89 = vand.u32 %v88, 127
    %v90 = vadd.s32 %v89, 128
    %v91 = vadd.s32 %v89, 256
    %v92 = vadd.s32 %v89, 384
    %v93 = vld [vmem:[#allocation2] sm:$0xff]
    %v94 = vld [vmem:[#allocation2 + $0x8] sm:$0xff]
    %v95 = vld [vmem:[#allocation2 + $0x10] sm:$0xff]
    %v96 = vld [vmem:[#allocation2 + $0x18] sm:$0xff]
    %v97 = vld [vmem:[#allocation2 + $0x20] sm:$0xff]
    %v98 = vld [vmem:[#allocation2 + $0x28] sm:$0xff]
    %v99 = vld [vmem:[#allocation2 + $0x30] sm:$0xff]
    %v100 = vld [vmem:[#allocation2 + $0x38] sm:$0xff]
    %v101 = vld [vmem:[#allocation2 + $0x40] sm:$0xff]
    %v102 = vld [vmem:[#allocation2 + $0x48] sm:$0xff]
    %v103 = vld [vmem:[#allocation2 + $0x50] sm:$0xff]
    %v104 = vld [vmem:[#allocation2 + $0x58] sm:$0xff]
    %v105 = vld [vmem:[#allocation2 + $0x60] sm:$0xff]
    %v106 = vld [vmem:[#allocation2 + $0x68] sm:$0xff]
    %v107 = vld [vmem:[#allocation2 + $0x70] sm:$0xff]
    %v108 = vld [vmem:[#allocation2 + $0x78] sm:$0xff]
    %v109 = vld [vmem:[#allocation2 + $0x80] sm:$0xff]
    %v110 = vld [vmem:[#allocation2 + $0x88] sm:$0xff]
    %v111 = vld [vmem:[#allocation2 + $0x90] sm:$0xff]
    %v112 = vld [vmem:[#allocation2 + $0x98] sm:$0xff]
    %v113 = vld [vmem:[#allocation2 + $0xa0] sm:$0xff]
    %v114 = vld [vmem:[#allocation2 + $0xa8] sm:$0xff]
    %v115 = vld [vmem:[#allocation2 + $0xb0] sm:$0xff]
    %v116 = vld [vmem:[#allocation2 + $0xb8] sm:$0xff]
    %v117 = vld [vmem:[#allocation2 + $0xc0] sm:$0xff]
    %v118 = vld [vmem:[#allocation2 + $0xc8] sm:$0xff]
    %v119 = vld [vmem:[#allocation2 + $0xd0] sm:$0xff]
    %v120 = vld [vmem:[#allocation2 + $0xd8] sm:$0xff]
    %v121 = vld [vmem:[#allocation2 + $0xe0] sm:$0xff]
    %v122 = vld [vmem:[#allocation2 + $0xe8] sm:$0xff]
    %v123 = vld [vmem:[#allocation2 + $0xf0] sm:$0xff]
    %v124 = vld [vmem:[#allocation2 + $0xf8] sm:$0xff]
    %v125 = vld [vmem:[#allocation2 + $0x100] sm:$0xff]
    %v126 = vld [vmem:[#allocation2 + $0x108] sm:$0xff]
    %v127 = vld [vmem:[#allocation2 + $0x110] sm:$0xff]
    %v128 = vld [vmem:[#allocation2 + $0x118] sm:$0xff]
    %v129 = vld [vmem:[#allocation2 + $0x120] sm:$0xff]
    %v130 = vld [vmem:[#allocation2 + $0x128] sm:$0xff]
    %v131 = vld [vmem:[#allocation2 + $0x130] sm:$0xff]
    %v132 = vld [vmem:[#allocation2 + $0x138] sm:$0xff]
    %v133 = vld [vmem:[#allocation2 + $0x140] sm:$0xff]
    %v134 = vld [vmem:[#allocation2 + $0x148] sm:$0xff]
    %v135 = vld [vmem:[#allocation2 + $0x150] sm:$0xff]
    %v136 = vld [vmem:[#allocation2 + $0x158] sm:$0xff]
    %v137 = vld [vmem:[#allocation2 + $0x160] sm:$0xff]
    %v138 = vld [vmem:[#allocation2 + $0x168] sm:$0xff]
    %v139 = vld [vmem:[#allocation2 + $0x170] sm:$0xff]
    %v140 = vld [vmem:[#allocation2 + $0x178] sm:$0xff]
    %v141 = vld [vmem:[#allocation2 + $0x180] sm:$0xff]
    %v142 = vld [vmem:[#allocation2 + $0x188] sm:$0xff]
    %v143 = vld [vmem:[#allocation2 + $0x190] sm:$0xff]
    %v144 = vld [vmem:[#allocation2 + $0x198] sm:$0xff]
    %v145 = vld [vmem:[#allocation2 + $0x1a0] sm:$0xff]
    %v146 = vld [vmem:[#allocation2 + $0x1a8] sm:$0xff]
    %v147 = vld [vmem:[#allocation2 + $0x1b0] sm:$0xff]
    %v148 = vld [vmem:[#allocation2 + $0x1b8] sm:$0xff]
    %v149 = vld [vmem:[#allocation2 + $0x1c0] sm:$0xff]
    %v150 = vld [vmem:[#allocation2 + $0x1c8] sm:$0xff]
    %v151 = vld [vmem:[#allocation2 + $0x1d0] sm:$0xff]
    %v152 = vld [vmem:[#allocation2 + $0x1d8] sm:$0xff]
    %v153 = vld [vmem:[#allocation2 + $0x1e0] sm:$0xff]
    %v154 = vld [vmem:[#allocation2 + $0x1e8] sm:$0xff]
    %v155 = vld [vmem:[#allocation2 + $0x1f0] sm:$0xff]
    %v156 = vld [vmem:[#allocation2 + $0x1f8] sm:$0xff]
    %v157 = vld [vmem:[#allocation2 + $0x200] sm:$0xff]
    %v158 = vld [vmem:[#allocation2 + $0x208] sm:$0xff]
    %v159 = vld [vmem:[#allocation2 + $0x210] sm:$0xff]
    %v160 = vld [vmem:[#allocation2 + $0x218] sm:$0xff]
    %v161 = vld [vmem:[#allocation2 + $0x220] sm:$0xff]
    %v162 = vld [vmem:[#allocation2 + $0x228] sm:$0xff]
    %v163 = vld [vmem:[#allocation2 + $0x230] sm:$0xff]
    %v164 = vld [vmem:[#allocation2 + $0x238] sm:$0xff]
    %v165 = vld [vmem:[#allocation2 + $0x240] sm:$0xff]
    %v166 = vld [vmem:[#allocation2 + $0x248] sm:$0xff]
    %v167 = vld [vmem:[#allocation2 + $0x250] sm:$0xff]
    %v168 = vld [vmem:[#allocation2 + $0x258] sm:$0xff]
    %v169 = vld [vmem:[#allocation2 + $0x260] sm:$0xff]
    %v170 = vld [vmem:[#allocation2 + $0x268] sm:$0xff]
    %v171 = vld [vmem:[#allocation2 + $0x270] sm:$0xff]
    %v172 = vld [vmem:[#allocation2 + $0x278] sm:$0xff]
    %v173 = vld [vmem:[#allocation2 + $0x280] sm:$0xff]
    %v174 = vld [vmem:[#allocation2 + $0x288] sm:$0xff]
    %v175 = vld [vmem:[#allocation2 + $0x290] sm:$0xff]
    %v176 = vld [vmem:[#allocation2 + $0x298] sm:$0xff]
    %v177 = vld [vmem:[#allocation2 + $0x2a0] sm:$0xff]
    %v178 = vld [vmem:[#allocation2 + $0x2a8] sm:$0xff]
    %v179 = vld [vmem:[#allocation2 + $0x2b0] sm:$0xff]
    %v180 = vld [vmem:[#allocation2 + $0x2b8] sm:$0xff]
    %v181 = vld [vmem:[#allocation2 + $0x2c0] sm:$0xff]
    %v182 = vld [vmem:[#allocation2 + $0x2c8] sm:$0xff]
    %v183 = vld [vmem:[#allocation2 + $0x2d0] sm:$0xff]
    %v184 = vld [vmem:[#allocation2 + $0x2d8] sm:$0xff]
    %v185 = vld [vmem:[#allocation2 + $0x2e0] sm:$0xff]
    %v186 = vld [vmem:[#allocation2 + $0x2e8] sm:$0xff]
    %v187 = vld [vmem:[#allocation2 + $0x2f0] sm:$0xff]
    %v188 = vld [vmem:[#allocation2 + $0x2f8] sm:$0xff]
    %v189 = vld [vmem:[#allocation2 + $0x300] sm:$0xff]
    %v190 = vld [vmem:[#allocation2 + $0x308] sm:$0xff]
    %v191 = vld [vmem:[#allocation2 + $0x310] sm:$0xff]
    %v192 = vld [vmem:[#allocation2 + $0x318] sm:$0xff]
    %v193 = vld [vmem:[#allocation2 + $0x320] sm:$0xff]
    %v194 = vld [vmem:[#allocation2 + $0x328] sm:$0xff]
    %v195 = vld [vmem:[#allocation2 + $0x330] sm:$0xff]
    %v196 = vld [vmem:[#allocation2 + $0x338] sm:$0xff]
    %v197 = vld [vmem:[#allocation2 + $0x340] sm:$0xff]
    %v198 = vld [vmem:[#allocation2 + $0x348] sm:$0xff]
    %v199 = vld [vmem:[#allocation2 + $0x350] sm:$0xff]
    %v200 = vld [vmem:[#allocation2 + $0x358] sm:$0xff]
    %v201 = vld [vmem:[#allocation2 + $0x360] sm:$0xff]
    %v202 = vld [vmem:[#allocation2 + $0x368] sm:$0xff]
    %v203 = vld [vmem:[#allocation2 + $0x370] sm:$0xff]
    %v204 = vld [vmem:[#allocation2 + $0x378] sm:$0xff]
    %v205 = vld [vmem:[#allocation2 + $0x380] sm:$0xff]
    %v206 = vld [vmem:[#allocation2 + $0x388] sm:$0xff]
    %v207 = vld [vmem:[#allocation2 + $0x390] sm:$0xff]
    %v208 = vld [vmem:[#allocation2 + $0x398] sm:$0xff]
    %v209 = vld [vmem:[#allocation2 + $0x3a0] sm:$0xff]
    %v210 = vld [vmem:[#allocation2 + $0x3a8] sm:$0xff]
    %v211 = vld [vmem:[#allocation2 + $0x3b0] sm:$0xff]
    %v212 = vld [vmem:[#allocation2 + $0x3b8] sm:$0xff]
    %v213 = vld [vmem:[#allocation2 + $0x3c0] sm:$0xff]
    %v214 = vld [vmem:[#allocation2 + $0x3c8] sm:$0xff]
    %v215 = vld [vmem:[#allocation2 + $0x3d0] sm:$0xff]
    %v216 = vld [vmem:[#allocation2 + $0x3d8] sm:$0xff]
    %v217 = vld [vmem:[#allocation2 + $0x3e0] sm:$0xff]
    %v218 = vld [vmem:[#allocation2 + $0x3e8] sm:$0xff]
    %v219 = vld [vmem:[#allocation2 + $0x3f0] sm:$0xff]
    %v220 = vld [vmem:[#allocation2 + $0x3f8] sm:$0xff]
    %v221 = vld [vmem:[#allocation2 + $0x400] sm:$0xff]
    %v222 = vld [vmem:[#allocation2 + $0x408] sm:$0xff]
    %v223 = vld [vmem:[#allocation2 + $0x410] sm:$0xff]
    %v224 = vld [vmem:[#allocation2 + $0x418] sm:$0xff]
    %v225 = vld [vmem:[#allocation2 + $0x420] sm:$0xff]
    %v226 = vld [vmem:[#allocation2 + $0x428] sm:$0xff]
    %v227 = vld [vmem:[#allocation2 + $0x430] sm:$0xff]
    %v228 = vld [vmem:[#allocation2 + $0x438] sm:$0xff]
    %v229 = vld [vmem:[#allocation2 + $0x440] sm:$0xff]
    %v230 = vld [vmem:[#allocation2 + $0x448] sm:$0xff]
    %v231 = vld [vmem:[#allocation2 + $0x450] sm:$0xff]
    %v232 = vld [vmem:[#allocation2 + $0x458] sm:$0xff]
    %v233 = vld [vmem:[#allocation2 + $0x460] sm:$0xff]
    %v234 = vld [vmem:[#allocation2 + $0x468] sm:$0xff]
    %v235 = vld [vmem:[#allocation2 + $0x470] sm:$0xff]
    %v236 = vld [vmem:[#allocation2 + $0x478] sm:$0xff]
    %v237 = vld [vmem:[#allocation2 + $0x480] sm:$0xff]
    %v238 = vld [vmem:[#allocation2 + $0x488] sm:$0xff]
    %v239 = vld [vmem:[#allocation2 + $0x490] sm:$0xff]
    %v240 = vld [vmem:[#allocation2 + $0x498] sm:$0xff]
    %v241 = vld [vmem:[#allocation2 + $0x4a0] sm:$0xff]
    %v242 = vld [vmem:[#allocation2 + $0x4a8] sm:$0xff]
    %v243 = vld [vmem:[#allocation2 + $0x4b0] sm:$0xff]
    %v244 = vld [vmem:[#allocation2 + $0x4b8] sm:$0xff]
    %v245 = vld [vmem:[#allocation2 + $0x4c0] sm:$0xff]
    %v246 = vld [vmem:[#allocation2 + $0x4c8] sm:$0xff]
    %v247 = vld [vmem:[#allocation2 + $0x4d0] sm:$0xff]
    %v248 = vld [vmem:[#allocation2 + $0x4d8] sm:$0xff]
    %v249 = vld [vmem:[#allocation2 + $0x4e0] sm:$0xff]
    %v250 = vld [vmem:[#allocation2 + $0x4e8] sm:$0xff]
    %v251 = vld [vmem:[#allocation2 + $0x4f0] sm:$0xff]
    %v252 = vld [vmem:[#allocation2 + $0x4f8] sm:$0xff]
    %v253 = vld [vmem:[#allocation2 + $0x500] sm:$0xff]
    %v254 = vld [vmem:[#allocation2 + $0x508] sm:$0xff]
    %v255 = vld [vmem:[#allocation2 + $0x510] sm:$0xff]
    %v256 = vld [vmem:[#allocation2 + $0x518] sm:$0xff]
    %v257 = vld [vmem:[#allocation2 + $0x520] sm:$0xff]
    %v258 = vld [vmem:[#allocation2 + $0x528] sm:$0xff]
    %v259 = vld [vmem:[#allocation2 + $0x530] sm:$0xff]
    %v260 = vld [vmem:[#allocation2 + $0x538] sm:$0xff]
    %v261 = vld [vmem:[#allocation2 + $0x540] sm:$0xff]
    %v262 = vld [vmem:[#allocation2 + $0x548] sm:$0xff]
    %v263 = vld [vmem:[#allocation2 + $0x550] sm:$0xff]
    %v264 = vld [vmem:[#allocation2 + $0x558] sm:$0xff]
    %v265 = vld [vmem:[#allocation2 + $0x560] sm:$0xff]
    %v266 = vld [vmem:[#allocation2 + $0x568] sm:$0xff]
    %v267 = vld [vmem:[#allocation2 + $0x570] sm:$0xff]
    %v268 = vld [vmem:[#allocation2 + $0x578] sm:$0xff]
    %v269 = vld [vmem:[#allocation2 + $0x580] sm:$0xff]
    %v270 = vld [vmem:[#allocation2 + $0x588] sm:$0xff]
    %v271 = vld [vmem:[#allocation2 + $0x590] sm:$0xff]
    %v272 = vld [vmem:[#allocation2 + $0x598] sm:$0xff]
    %v273 = vld [vmem:[#allocation2 + $0x5a0] sm:$0xff]
    %v274 = vld [vmem:[#allocation2 + $0x5a8] sm:$0xff]
    %v275 = vld [vmem:[#allocation2 + $0x5b0] sm:$0xff]
    %v276 = vld [vmem:[#allocation2 + $0x5b8] sm:$0xff]
    %v277 = vld [vmem:[#allocation2 + $0x5c0] sm:$0xff]
    %v278 = vld [vmem:[#allocation2 + $0x5c8] sm:$0xff]
    %v279 = vld [vmem:[#allocation2 + $0x5d0] sm:$0xff]
    %v280 = vld [vmem:[#allocation2 + $0x5d8] sm:$0xff]
    %v281 = vld [vmem:[#allocation2 + $0x5e0] sm:$0xff]
    %v282 = vld [vmem:[#allocation2 + $0x5e8] sm:$0xff]
    %v283 = vld [vmem:[#allocation2 + $0x5f0] sm:$0xff]
    %v284 = vld [vmem:[#allocation2 + $0x5f8] sm:$0xff]
    %v285 = vld [vmem:[#allocation2 + $0x600] sm:$0xff]
    %v286 = vld [vmem:[#allocation2 + $0x608] sm:$0xff]
    %v287 = vld [vmem:[#allocation2 + $0x610] sm:$0xff]
    %v288 = vld [vmem:[#allocation2 + $0x618] sm:$0xff]
    %v289 = vld [vmem:[#allocation2 + $0x620] sm:$0xff]
    %v290 = vld [vmem:[#allocation2 + $0x628] sm:$0xff]
    %v291 = vld [vmem:[#allocation2 + $0x630] sm:$0xff]
    %v292 = vld [vmem:[#allocation2 + $0x638] sm:$0xff]
    %v293 = vld [vmem:[#allocation2 + $0x640] sm:$0xff]
    %v294 = vld [vmem:[#allocation2 + $0x648] sm:$0xff]
    %v295 = vld [vmem:[#allocation2 + $0x650] sm:$0xff]
    %v296 = vld [vmem:[#allocation2 + $0x658] sm:$0xff]
    %v297 = vld [vmem:[#allocation2 + $0x660] sm:$0xff]
    %v298 = vld [vmem:[#allocation2 + $0x668] sm:$0xff]
    %v299 = vld [vmem:[#allocation2 + $0x670] sm:$0xff]
    %v300 = vld [vmem:[#allocation2 + $0x678] sm:$0xff]
    %v301 = vld [vmem:[#allocation2 + $0x680] sm:$0xff]
    %v302 = vld [vmem:[#allocation2 + $0x688] sm:$0xff]
    %v303 = vld [vmem:[#allocation2 + $0x690] sm:$0xff]
    %v304 = vld [vmem:[#allocation2 + $0x698] sm:$0xff]
    %v305 = vld [vmem:[#allocation2 + $0x6a0] sm:$0xff]
    %v306 = vld [vmem:[#allocation2 + $0x6a8] sm:$0xff]
    %v307 = vld [vmem:[#allocation2 + $0x6b0] sm:$0xff]
    %v308 = vld [vmem:[#allocation2 + $0x6b8] sm:$0xff]
    %v309 = vld [vmem:[#allocation2 + $0x6c0] sm:$0xff]
    %v310 = vld [vmem:[#allocation2 + $0x6c8] sm:$0xff]
    %v311 = vld [vmem:[#allocation2 + $0x6d0] sm:$0xff]
    %v312 = vld [vmem:[#allocation2 + $0x6d8] sm:$0xff]
    %v313 = vld [vmem:[#allocation2 + $0x6e0] sm:$0xff]
    %v314 = vld [vmem:[#allocation2 + $0x6e8] sm:$0xff]
    %v315 = vld [vmem:[#allocation2 + $0x6f0] sm:$0xff]
    %v316 = vld [vmem:[#allocation2 + $0x6f8] sm:$0xff]
    %v317 = vld [vmem:[#allocation2 + $0x700] sm:$0xff]
    %v318 = vld [vmem:[#allocation2 + $0x708] sm:$0xff]
    %v319 = vld [vmem:[#allocation2 + $0x710] sm:$0xff]
    %v320 = vld [vmem:[#allocation2 + $0x718] sm:$0xff]
    %v321 = vld [vmem:[#allocation2 + $0x720] sm:$0xff]
    %v322 = vld [vmem:[#allocation2 + $0x728] sm:$0xff]
    %v323 = vld [vmem:[#allocation2 + $0x730] sm:$0xff]
    %v324 = vld [vmem:[#allocation2 + $0x738] sm:$0xff]
    %v325 = vld [vmem:[#allocation2 + $0x740] sm:$0xff]
    %v326 = vld [vmem:[#allocation2 + $0x748] sm:$0xff]
    %v327 = vld [vmem:[#allocation2 + $0x750] sm:$0xff]
    %v328 = vld [vmem:[#allocation2 + $0x758] sm:$0xff]
    %v329 = vld [vmem:[#allocation2 + $0x760] sm:$0xff]
    %v330 = vld [vmem:[#allocation2 + $0x768] sm:$0xff]
    %v331 = vld [vmem:[#allocation2 + $0x770] sm:$0xff]
    %v332 = vld [vmem:[#allocation2 + $0x778] sm:$0xff]
    %v333 = vld [vmem:[#allocation2 + $0x780] sm:$0xff]
    %v334 = vld [vmem:[#allocation2 + $0x788] sm:$0xff]
    %v335 = vld [vmem:[#allocation2 + $0x790] sm:$0xff]
    %v336 = vld [vmem:[#allocation2 + $0x798] sm:$0xff]
    %v337 = vld [vmem:[#allocation2 + $0x7a0] sm:$0xff]
    %v338 = vld [vmem:[#allocation2 + $0x7a8] sm:$0xff]
    %v339 = vld [vmem:[#allocation2 + $0x7b0] sm:$0xff]
    %v340 = vld [vmem:[#allocation2 + $0x7b8] sm:$0xff]
    %v341 = vld [vmem:[#allocation2 + $0x7c0] sm:$0xff]
    %v342 = vld [vmem:[#allocation2 + $0x7c8] sm:$0xff]
    %v343 = vld [vmem:[#allocation2 + $0x7d0] sm:$0xff]
    %v344 = vld [vmem:[#allocation2 + $0x7d8] sm:$0xff]
    %v345 = vld [vmem:[#allocation2 + $0x7e0] sm:$0xff]
    %v346 = vld [vmem:[#allocation2 + $0x7e8] sm:$0xff]
    %v347 = vld [vmem:[#allocation2 + $0x7f0] sm:$0xff]
    %v348 = vld [vmem:[#allocation2 + $0x7f8] sm:$0xff]
    %vm349 = vcmp.eq.s32.totalorder %v24, %v89
    %vm350 = vcmp.eq.s32.totalorder %v24, %v90
    %vm351 = vcmp.eq.s32.totalorder %v24, %v91
    %vm352 = vcmp.eq.s32.totalorder %v24, %v92
    %vm353 = vcmp.eq.s32.totalorder %v25, %v89
    %vm354 = vcmp.eq.s32.totalorder %v25, %v90
    %vm355 = vcmp.eq.s32.totalorder %v25, %v91
    %vm356 = vcmp.eq.s32.totalorder %v25, %v92
    %vm357 = vcmp.eq.s32.totalorder %v26, %v89
    %vm358 = vcmp.eq.s32.totalorder %v26, %v90
    %vm359 = vcmp.eq.s32.totalorder %v26, %v91
    %vm360 = vcmp.eq.s32.totalorder %v26, %v92
    %vm361 = vcmp.eq.s32.totalorder %v27, %v89
    %vm362 = vcmp.eq.s32.totalorder %v27, %v90
    %vm363 = vcmp.eq.s32.totalorder %v27, %v91
    %vm364 = vcmp.eq.s32.totalorder %v27, %v92
    %vm365 = vcmp.eq.s32.totalorder %v28, %v89
    %vm366 = vcmp.eq.s32.totalorder %v28, %v90
    %vm367 = vcmp.eq.s32.totalorder %v28, %v91
    %vm368 = vcmp.eq.s32.totalorder %v28, %v92
    %vm369 = vcmp.eq.s32.totalorder %v29, %v89
    %vm370 = vcmp.eq.s32.totalorder %v29, %v90
    %vm371 = vcmp.eq.s32.totalorder %v29, %v91
    %vm372 = vcmp.eq.s32.totalorder %v29, %v92
    %vm373 = vcmp.eq.s32.totalorder %v30, %v89
    %vm374 = vcmp.eq.s32.totalorder %v30, %v90
    %vm375 = vcmp.eq.s32.totalorder %v30, %v91
    %vm376 = vcmp.eq.s32.totalorder %v30, %v92
    %vm377 = vcmp.eq.s32.totalorder %v31, %v89
    %vm378 = vcmp.eq.s32.totalorder %v31, %v90
    %vm379 = vcmp.eq.s32.totalorder %v31, %v91
    %vm380 = vcmp.eq.s32.totalorder %v31, %v92
    %vm381 = vcmp.eq.s32.totalorder %v32, %v89
    %vm382 = vcmp.eq.s32.totalorder %v32, %v90
    %vm383 = vcmp.eq.s32.totalorder %v32, %v91
    %vm384 = vcmp.eq.s32.totalorder %v32, %v92
    %vm385 = vcmp.eq.s32.totalorder %v33, %v89
    %vm386 = vcmp.eq.s32.totalorder %v33, %v90
    %vm387 = vcmp.eq.s32.totalorder %v33, %v91
    %vm388 = vcmp.eq.s32.totalorder %v33, %v92
    %vm389 = vcmp.eq.s32.totalorder %v34, %v89
    %vm390 = vcmp.eq.s32.totalorder %v34, %v90
    %vm391 = vcmp.eq.s32.totalorder %v34, %v91
    %vm392 = vcmp.eq.s32.totalorder %v34, %v92
    %vm393 = vcmp.eq.s32.totalorder %v35, %v89
    %vm394 = vcmp.eq.s32.totalorder %v35, %v90
    %vm395 = vcmp.eq.s32.totalorder %v35, %v91
    %vm396 = vcmp.eq.s32.totalorder %v35, %v92
    %vm397 = vcmp.eq.s32.totalorder %v36, %v89
    %vm398 = vcmp.eq.s32.totalorder %v36, %v90
    %vm399 = vcmp.eq.s32.totalorder %v36, %v91
    %vm400 = vcmp.eq.s32.totalorder %v36, %v92
    %vm401 = vcmp.eq.s32.totalorder %v37, %v89
    %vm402 = vcmp.eq.s32.totalorder %v37, %v90
    %vm403 = vcmp.eq.s32.totalorder %v37, %v91
    %vm404 = vcmp.eq.s32.totalorder %v37, %v92
    %vm405 = vcmp.eq.s32.totalorder %v38, %v89
    %vm406 = vcmp.eq.s32.totalorder %v38, %v90
    %vm407 = vcmp.eq.s32.totalorder %v38, %v91
    %vm408 = vcmp.eq.s32.totalorder %v38, %v92
    %vm409 = vcmp.eq.s32.totalorder %v39, %v89
    %vm410 = vcmp.eq.s32.totalorder %v39, %v90
    %vm411 = vcmp.eq.s32.totalorder %v39, %v91
    %vm412 = vcmp.eq.s32.totalorder %v39, %v92
    %vm413 = vcmp.eq.s32.totalorder %v40, %v89
    %vm414 = vcmp.eq.s32.totalorder %v40, %v90
    %vm415 = vcmp.eq.s32.totalorder %v40, %v91
    %vm416 = vcmp.eq.s32.totalorder %v40, %v92
    %vm417 = vcmp.eq.s32.totalorder %v41, %v89
    %vm418 = vcmp.eq.s32.totalorder %v41, %v90
    %vm419 = vcmp.eq.s32.totalorder %v41, %v91
    %vm420 = vcmp.eq.s32.totalorder %v41, %v92
    %vm421 = vcmp.eq.s32.totalorder %v42, %v89
    %vm422 = vcmp.eq.s32.totalorder %v42, %v90
    %vm423 = vcmp.eq.s32.totalorder %v42, %v91
    %vm424 = vcmp.eq.s32.totalorder %v42, %v92
    %vm425 = vcmp.eq.s32.totalorder %v43, %v89
    %vm426 = vcmp.eq.s32.totalorder %v43, %v90
    %vm427 = vcmp.eq.s32.totalorder %v43, %v91
    %vm428 = vcmp.eq.s32.totalorder %v43, %v92
    %vm429 = vcmp.eq.s32.totalorder %v44, %v89
    %vm430 = vcmp.eq.s32.totalorder %v44, %v90
    %vm431 = vcmp.eq.s32.totalorder %v44, %v91
    %vm432 = vcmp.eq.s32.totalorder %v44, %v92
    %vm433 = vcmp.eq.s32.totalorder %v45, %v89
    %vm434 = vcmp.eq.s32.totalorder %v45, %v90
    %vm435 = vcmp.eq.s32.totalorder %v45, %v91
    %vm436 = vcmp.eq.s32.totalorder %v45, %v92
    %vm437 = vcmp.eq.s32.totalorder %v46, %v89
    %vm438 = vcmp.eq.s32.totalorder %v46, %v90
    %vm439 = vcmp.eq.s32.totalorder %v46, %v91
    %vm440 = vcmp.eq.s32.totalorder %v46, %v92
    %vm441 = vcmp.eq.s32.totalorder %v47, %v89
    %vm442 = vcmp.eq.s32.totalorder %v47, %v90
    %vm443 = vcmp.eq.s32.totalorder %v47, %v91
    %vm444 = vcmp.eq.s32.totalorder %v47, %v92
    %vm445 = vcmp.eq.s32.totalorder %v48, %v89
    %vm446 = vcmp.eq.s32.totalorder %v48, %v90
    %vm447 = vcmp.eq.s32.totalorder %v48, %v91
    %vm448 = vcmp.eq.s32.totalorder %v48, %v92
    %vm449 = vcmp.eq.s32.totalorder %v49, %v89
    %vm450 = vcmp.eq.s32.totalorder %v49, %v90
    %vm451 = vcmp.eq.s32.totalorder %v49, %v91
    %vm452 = vcmp.eq.s32.totalorder %v49, %v92
    %vm453 = vcmp.eq.s32.totalorder %v50, %v89
    %vm454 = vcmp.eq.s32.totalorder %v50, %v90
    %vm455 = vcmp.eq.s32.totalorder %v50, %v91
    %vm456 = vcmp.eq.s32.totalorder %v50, %v92
    %vm457 = vcmp.eq.s32.totalorder %v51, %v89
    %vm458 = vcmp.eq.s32.totalorder %v51, %v90
    %vm459 = vcmp.eq.s32.totalorder %v51, %v91
    %vm460 = vcmp.eq.s32.totalorder %v51, %v92
    %vm461 = vcmp.eq.s32.totalorder %v52, %v89
    %vm462 = vcmp.eq.s32.totalorder %v52, %v90
    %vm463 = vcmp.eq.s32.totalorder %v52, %v91
    %vm464 = vcmp.eq.s32.totalorder %v52, %v92
    %vm465 = vcmp.eq.s32.totalorder %v53, %v89
    %vm466 = vcmp.eq.s32.totalorder %v53, %v90
    %vm467 = vcmp.eq.s32.totalorder %v53, %v91
    %vm468 = vcmp.eq.s32.totalorder %v53, %v92
    %vm469 = vcmp.eq.s32.totalorder %v54, %v89
    %vm470 = vcmp.eq.s32.totalorder %v54, %v90
    %vm471 = vcmp.eq.s32.totalorder %v54, %v91
    %vm472 = vcmp.eq.s32.totalorder %v54, %v92
    %vm473 = vcmp.eq.s32.totalorder %v55, %v89
    %vm474 = vcmp.eq.s32.totalorder %v55, %v90
    %vm475 = vcmp.eq.s32.totalorder %v55, %v91
    %vm476 = vcmp.eq.s32.totalorder %v55, %v92
    %vm477 = vcmp.eq.s32.totalorder %v56, %v89
    %vm478 = vcmp.eq.s32.totalorder %v56, %v90
    %vm479 = vcmp.eq.s32.totalorder %v56, %v91
    %vm480 = vcmp.eq.s32.totalorder %v56, %v92
    %vm481 = vcmp.eq.s32.totalorder %v57, %v89
    %vm482 = vcmp.eq.s32.totalorder %v57, %v90
    %vm483 = vcmp.eq.s32.totalorder %v57, %v91
    %vm484 = vcmp.eq.s32.totalorder %v57, %v92
    %vm485 = vcmp.eq.s32.totalorder %v58, %v89
    %vm486 = vcmp.eq.s32.totalorder %v58, %v90
    %vm487 = vcmp.eq.s32.totalorder %v58, %v91
    %vm488 = vcmp.eq.s32.totalorder %v58, %v92
    %vm489 = vcmp.eq.s32.totalorder %v59, %v89
    %vm490 = vcmp.eq.s32.totalorder %v59, %v90
    %vm491 = vcmp.eq.s32.totalorder %v59, %v91
    %vm492 = vcmp.eq.s32.totalorder %v59, %v92
    %vm493 = vcmp.eq.s32.totalorder %v60, %v89
    %vm494 = vcmp.eq.s32.totalorder %v60, %v90
    %vm495 = vcmp.eq.s32.totalorder %v60, %v91
    %vm496 = vcmp.eq.s32.totalorder %v60, %v92
    %vm497 = vcmp.eq.s32.totalorder %v61, %v89
    %vm498 = vcmp.eq.s32.totalorder %v61, %v90
    %vm499 = vcmp.eq.s32.totalorder %v61, %v91
    %vm500 = vcmp.eq.s32.totalorder %v61, %v92
    %vm501 = vcmp.eq.s32.totalorder %v62, %v89
    %vm502 = vcmp.eq.s32.totalorder %v62, %v90
    %vm503 = vcmp.eq.s32.totalorder %v62, %v91
    %vm504 = vcmp.eq.s32.totalorder %v62, %v92
    %vm505 = vcmp.eq.s32.totalorder %v63, %v89
    %vm506 = vcmp.eq.s32.totalorder %v63, %v90
    %vm507 = vcmp.eq.s32.totalorder %v63, %v91
    %vm508 = vcmp.eq.s32.totalorder %v63, %v92
    %vm509 = vcmp.eq.s32.totalorder %v64, %v89
    %vm510 = vcmp.eq.s32.totalorder %v64, %v90
    %vm511 = vcmp.eq.s32.totalorder %v64, %v91
    %vm512 = vcmp.eq.s32.totalorder %v64, %v92
    %vm513 = vcmp.eq.s32.totalorder %v65, %v89
    %vm514 = vcmp.eq.s32.totalorder %v65, %v90
    %vm515 = vcmp.eq.s32.totalorder %v65, %v91
    %vm516 = vcmp.eq.s32.totalorder %v65, %v92
    %vm517 = vcmp.eq.s32.totalorder %v66, %v89
    %vm518 = vcmp.eq.s32.totalorder %v66, %v90
    %vm519 = vcmp.eq.s32.totalorder %v66, %v91
    %vm520 = vcmp.eq.s32.totalorder %v66, %v92
    %vm521 = vcmp.eq.s32.totalorder %v67, %v89
    %vm522 = vcmp.eq.s32.totalorder %v67, %v90
    %vm523 = vcmp.eq.s32.totalorder %v67, %v91
    %vm524 = vcmp.eq.s32.totalorder %v67, %v92
    %vm525 = vcmp.eq.s32.totalorder %v68, %v89
    %vm526 = vcmp.eq.s32.totalorder %v68, %v90
    %vm527 = vcmp.eq.s32.totalorder %v68, %v91
    %vm528 = vcmp.eq.s32.totalorder %v68, %v92
    %vm529 = vcmp.eq.s32.totalorder %v69, %v89
    %vm530 = vcmp.eq.s32.totalorder %v69, %v90
    %vm531 = vcmp.eq.s32.totalorder %v69, %v91
    %vm532 = vcmp.eq.s32.totalorder %v69, %v92
    %vm533 = vcmp.eq.s32.totalorder %v70, %v89
    %vm534 = vcmp.eq.s32.totalorder %v70, %v90
    %vm535 = vcmp.eq.s32.totalorder %v70, %v91
    %vm536 = vcmp.eq.s32.totalorder %v70, %v92
    %vm537 = vcmp.eq.s32.totalorder %v71, %v89
    %vm538 = vcmp.eq.s32.totalorder %v71, %v90
    %vm539 = vcmp.eq.s32.totalorder %v71, %v91
    %vm540 = vcmp.eq.s32.totalorder %v71, %v92
    %vm541 = vcmp.eq.s32.totalorder %v72, %v89
    %vm542 = vcmp.eq.s32.totalorder %v72, %v90
    %vm543 = vcmp.eq.s32.totalorder %v72, %v91
    %vm544 = vcmp.eq.s32.totalorder %v72, %v92
    %vm545 = vcmp.eq.s32.totalorder %v73, %v89
    %vm546 = vcmp.eq.s32.totalorder %v73, %v90
    %vm547 = vcmp.eq.s32.totalorder %v73, %v91
    %vm548 = vcmp.eq.s32.totalorder %v73, %v92
    %vm549 = vcmp.eq.s32.totalorder %v74, %v89
    %vm550 = vcmp.eq.s32.totalorder %v74, %v90
    %vm551 = vcmp.eq.s32.totalorder %v74, %v91
    %vm552 = vcmp.eq.s32.totalorder %v74, %v92
    %vm553 = vcmp.eq.s32.totalorder %v75, %v89
    %vm554 = vcmp.eq.s32.totalorder %v75, %v90
    %vm555 = vcmp.eq.s32.totalorder %v75, %v91
    %vm556 = vcmp.eq.s32.totalorder %v75, %v92
    %vm557 = vcmp.eq.s32.totalorder %v76, %v89
    %vm558 = vcmp.eq.s32.totalorder %v76, %v90
    %vm559 = vcmp.eq.s32.totalorder %v76, %v91
    %vm560 = vcmp.eq.s32.totalorder %v76, %v92
    %vm561 = vcmp.eq.s32.totalorder %v77, %v89
    %vm562 = vcmp.eq.s32.totalorder %v77, %v90
    %vm563 = vcmp.eq.s32.totalorder %v77, %v91
    %vm564 = vcmp.eq.s32.totalorder %v77, %v92
    %vm565 = vcmp.eq.s32.totalorder %v78, %v89
    %vm566 = vcmp.eq.s32.totalorder %v78, %v90
    %vm567 = vcmp.eq.s32.totalorder %v78, %v91
    %vm568 = vcmp.eq.s32.totalorder %v78, %v92
    %vm569 = vcmp.eq.s32.totalorder %v79, %v89
    %vm570 = vcmp.eq.s32.totalorder %v79, %v90
    %vm571 = vcmp.eq.s32.totalorder %v79, %v91
    %vm572 = vcmp.eq.s32.totalorder %v79, %v92
    %vm573 = vcmp.eq.s32.totalorder %v80, %v89
    %vm574 = vcmp.eq.s32.totalorder %v80, %v90
    %vm575 = vcmp.eq.s32.totalorder %v80, %v91
    %vm576 = vcmp.eq.s32.totalorder %v80, %v92
    %vm577 = vcmp.eq.s32.totalorder %v81, %v89
    %vm578 = vcmp.eq.s32.totalorder %v81, %v90
    %vm579 = vcmp.eq.s32.totalorder %v81, %v91
    %vm580 = vcmp.eq.s32.totalorder %v81, %v92
    %vm581 = vcmp.eq.s32.totalorder %v82, %v89
    %vm582 = vcmp.eq.s32.totalorder %v82, %v90
    %vm583 = vcmp.eq.s32.totalorder %v82, %v91
    %vm584 = vcmp.eq.s32.totalorder %v82, %v92
    %vm585 = vcmp.eq.s32.totalorder %v83, %v89
    %vm586 = vcmp.eq.s32.totalorder %v83, %v90
    %vm587 = vcmp.eq.s32.totalorder %v83, %v91
    %vm588 = vcmp.eq.s32.totalorder %v83, %v92
    %vm589 = vcmp.eq.s32.totalorder %v84, %v89
    %vm590 = vcmp.eq.s32.totalorder %v84, %v90
    %vm591 = vcmp.eq.s32.totalorder %v84, %v91
    %vm592 = vcmp.eq.s32.totalorder %v84, %v92
    %vm593 = vcmp.eq.s32.totalorder %v85, %v89
    %vm594 = vcmp.eq.s32.totalorder %v85, %v90
    %vm595 = vcmp.eq.s32.totalorder %v85, %v91
    %vm596 = vcmp.eq.s32.totalorder %v85, %v92
    %vm597 = vcmp.eq.s32.totalorder %v86, %v89
    %vm598 = vcmp.eq.s32.totalorder %v86, %v90
    %vm599 = vcmp.eq.s32.totalorder %v86, %v91
    %vm600 = vcmp.eq.s32.totalorder %v86, %v92
    %vm601 = vcmp.eq.s32.totalorder %v87, %v89
    %vm602 = vcmp.eq.s32.totalorder %v87, %v90
    %vm603 = vcmp.eq.s32.totalorder %v87, %v91
    %vm604 = vcmp.eq.s32.totalorder %v87, %v92
    %v605 = vsel %vm349, 1.0, 0.0
    %v606 = vsel %vm350, 1.0, 0.0
    %v607 = vsel %vm351, 1.0, 0.0
    %v608 = vsel %vm352, 1.0, 0.0
    %v609 = vsel %vm353, 1.0, 0.0
    %v610 = vsel %vm354, 1.0, 0.0
    %v611 = vsel %vm355, 1.0, 0.0
    %v612 = vsel %vm356, 1.0, 0.0
    %v613 = vsel %vm357, 1.0, 0.0
    %v614 = vsel %vm358, 1.0, 0.0
    %v615 = vsel %vm359, 1.0, 0.0
    %v616 = vsel %vm360, 1.0, 0.0
    %v617 = vsel %vm361, 1.0, 0.0
    %v618 = vsel %vm362, 1.0, 0.0
    %v619 = vsel %vm363, 1.0, 0.0
    %v620 = vsel %vm364, 1.0, 0.0
    %v621 = vsel %vm365, 1.0, 0.0
    %v622 = vsel %vm366, 1.0, 0.0
    %v623 = vsel %vm367, 1.0, 0.0
    %v624 = vsel %vm368, 1.0, 0.0
    %v625 = vsel %vm369, 1.0, 0.0
    %v626 = vsel %vm370, 1.0, 0.0
    %v627 = vsel %vm371, 1.0, 0.0
    %v628 = vsel %vm372, 1.0, 0.0
    %v629 = vsel %vm373, 1.0, 0.0
    %v630 = vsel %vm374, 1.0, 0.0
    %v631 = vsel %vm375, 1.0, 0.0
    %v632 = vsel %vm376, 1.0, 0.0
    %v633 = vsel %vm377, 1.0, 0.0
    %v634 = vsel %vm378, 1.0, 0.0
    %v635 = vsel %vm379, 1.0, 0.0
    %v636 = vsel %vm380, 1.0, 0.0
    %v637 = vsel %vm381, 1.0, 0.0
    %v638 = vsel %vm382, 1.0, 0.0
    %v639 = vsel %vm383, 1.0, 0.0
    %v640 = vsel %vm384, 1.0, 0.0
    %v641 = vsel %vm385, 1.0, 0.0
    %v642 = vsel %vm386, 1.0, 0.0
    %v643 = vsel %vm387, 1.0, 0.0
    %v644 = vsel %vm388, 1.0, 0.0
    %v645 = vsel %vm389, 1.0, 0.0
    %v646 = vsel %vm390, 1.0, 0.0
    %v647 = vsel %vm391, 1.0, 0.0
    %v648 = vsel %vm392, 1.0, 0.0
    %v649 = vsel %vm393, 1.0, 0.0
    %v650 = vsel %vm394, 1.0, 0.0
    %v651 = vsel %vm395, 1.0, 0.0
    %v652 = vsel %vm396, 1.0, 0.0
    %v653 = vsel %vm397, 1.0, 0.0
    %v654 = vsel %vm398, 1.0, 0.0
    %v655 = vsel %vm399, 1.0, 0.0
    %v656 = vsel %vm400, 1.0, 0.0
    %v657 = vsel %vm401, 1.0, 0.0
    %v658 = vsel %vm402, 1.0, 0.0
    %v659 = vsel %vm403, 1.0, 0.0
    %v660 = vsel %vm404, 1.0, 0.0
    %v661 = vsel %vm405, 1.0, 0.0
    %v662 = vsel %vm406, 1.0, 0.0
    %v663 = vsel %vm407, 1.0, 0.0
    %v664 = vsel %vm408, 1.0, 0.0
    %v665 = vsel %vm409, 1.0, 0.0
    %v666 = vsel %vm410, 1.0, 0.0
    %v667 = vsel %vm411, 1.0, 0.0
    %v668 = vsel %vm412, 1.0, 0.0
    %v669 = vsel %vm413, 1.0, 0.0
    %v670 = vsel %vm414, 1.0, 0.0
    %v671 = vsel %vm415, 1.0, 0.0
    %v672 = vsel %vm416, 1.0, 0.0
    %v673 = vsel %vm417, 1.0, 0.0
    %v674 = vsel %vm418, 1.0, 0.0
    %v675 = vsel %vm419, 1.0, 0.0
    %v676 = vsel %vm420, 1.0, 0.0
    %v677 = vsel %vm421, 1.0, 0.0
    %v678 = vsel %vm422, 1.0, 0.0
    %v679 = vsel %vm423, 1.0, 0.0
    %v680 = vsel %vm424, 1.0, 0.0
    %v681 = vsel %vm425, 1.0, 0.0
    %v682 = vsel %vm426, 1.0, 0.0
    %v683 = vsel %vm427, 1.0, 0.0
    %v684 = vsel %vm428, 1.0, 0.0
    %v685 = vsel %vm429, 1.0, 0.0
    %v686 = vsel %vm430, 1.0, 0.0
    %v687 = vsel %vm431, 1.0, 0.0
    %v688 = vsel %vm432, 1.0, 0.0
    %v689 = vsel %vm433, 1.0, 0.0
    %v690 = vsel %vm434, 1.0, 0.0
    %v691 = vsel %vm435, 1.0, 0.0
    %v692 = vsel %vm436, 1.0, 0.0
    %v693 = vsel %vm437, 1.0, 0.0
    %v694 = vsel %vm438, 1.0, 0.0
    %v695 = vsel %vm439, 1.0, 0.0
    %v696 = vsel %vm440, 1.0, 0.0
    %v697 = vsel %vm441, 1.0, 0.0
    %v698 = vsel %vm442, 1.0, 0.0
    %v699 = vsel %vm443, 1.0, 0.0
    %v700 = vsel %vm444, 1.0, 0.0
    %v701 = vsel %vm445, 1.0, 0.0
    %v702 = vsel %vm446, 1.0, 0.0
    %v703 = vsel %vm447, 1.0, 0.0
    %v704 = vsel %vm448, 1.0, 0.0
    %v705 = vsel %vm449, 1.0, 0.0
    %v706 = vsel %vm450, 1.0, 0.0
    %v707 = vsel %vm451, 1.0, 0.0
    %v708 = vsel %vm452, 1.0, 0.0
    %v709 = vsel %vm453, 1.0, 0.0
    %v710 = vsel %vm454, 1.0, 0.0
    %v711 = vsel %vm455, 1.0, 0.0
    %v712 = vsel %vm456, 1.0, 0.0
    %v713 = vsel %vm457, 1.0, 0.0
    %v714 = vsel %vm458, 1.0, 0.0
    %v715 = vsel %vm459, 1.0, 0.0
    %v716 = vsel %vm460, 1.0, 0.0
    %v717 = vsel %vm461, 1.0, 0.0
    %v718 = vsel %vm462, 1.0, 0.0
    %v719 = vsel %vm463, 1.0, 0.0
    %v720 = vsel %vm464, 1.0, 0.0
    %v721 = vsel %vm465, 1.0, 0.0
    %v722 = vsel %vm466, 1.0, 0.0
    %v723 = vsel %vm467, 1.0, 0.0
    %v724 = vsel %vm468, 1.0, 0.0
    %v725 = vsel %vm469, 1.0, 0.0
    %v726 = vsel %vm470, 1.0, 0.0
    %v727 = vsel %vm471, 1.0, 0.0
    %v728 = vsel %vm472, 1.0, 0.0
    %v729 = vsel %vm473, 1.0, 0.0
    %v730 = vsel %vm474, 1.0, 0.0
    %v731 = vsel %vm475, 1.0, 0.0
    %v732 = vsel %vm476, 1.0, 0.0
    %v733 = vsel %vm477, 1.0, 0.0
    %v734 = vsel %vm478, 1.0, 0.0
    %v735 = vsel %vm479, 1.0, 0.0
    %v736 = vsel %vm480, 1.0, 0.0
    %v737 = vsel %vm481, 1.0, 0.0
    %v738 = vsel %vm482, 1.0, 0.0
    %v739 = vsel %vm483, 1.0, 0.0
    %v740 = vsel %vm484, 1.0, 0.0
    %v741 = vsel %vm485, 1.0, 0.0
    %v742 = vsel %vm486, 1.0, 0.0
    %v743 = vsel %vm487, 1.0, 0.0
    %v744 = vsel %vm488, 1.0, 0.0
    %v745 = vsel %vm489, 1.0, 0.0
    %v746 = vsel %vm490, 1.0, 0.0
    %v747 = vsel %vm491, 1.0, 0.0
    %v748 = vsel %vm492, 1.0, 0.0
    %v749 = vsel %vm493, 1.0, 0.0
    %v750 = vsel %vm494, 1.0, 0.0
    %v751 = vsel %vm495, 1.0, 0.0
    %v752 = vsel %vm496, 1.0, 0.0
    %v753 = vsel %vm497, 1.0, 0.0
    %v754 = vsel %vm498, 1.0, 0.0
    %v755 = vsel %vm499, 1.0, 0.0
    %v756 = vsel %vm500, 1.0, 0.0
    %v757 = vsel %vm501, 1.0, 0.0
    %v758 = vsel %vm502, 1.0, 0.0
    %v759 = vsel %vm503, 1.0, 0.0
    %v760 = vsel %vm504, 1.0, 0.0
    %v761 = vsel %vm505, 1.0, 0.0
    %v762 = vsel %vm506, 1.0, 0.0
    %v763 = vsel %vm507, 1.0, 0.0
    %v764 = vsel %vm508, 1.0, 0.0
    %v765 = vsel %vm509, 1.0, 0.0
    %v766 = vsel %vm510, 1.0, 0.0
    %v767 = vsel %vm511, 1.0, 0.0
    %v768 = vsel %vm512, 1.0, 0.0
    %v769 = vsel %vm513, 1.0, 0.0
    %v770 = vsel %vm514, 1.0, 0.0
    %v771 = vsel %vm515, 1.0, 0.0
    %v772 = vsel %vm516, 1.0, 0.0
    %v773 = vsel %vm517, 1.0, 0.0
    %v774 = vsel %vm518, 1.0, 0.0
    %v775 = vsel %vm519, 1.0, 0.0
    %v776 = vsel %vm520, 1.0, 0.0
    %v777 = vsel %vm521, 1.0, 0.0
    %v778 = vsel %vm522, 1.0, 0.0
    %v779 = vsel %vm523, 1.0, 0.0
    %v780 = vsel %vm524, 1.0, 0.0
    %v781 = vsel %vm525, 1.0, 0.0
    %v782 = vsel %vm526, 1.0, 0.0
    %v783 = vsel %vm527, 1.0, 0.0
    %v784 = vsel %vm528, 1.0, 0.0
    %v785 = vsel %vm529, 1.0, 0.0
    %v786 = vsel %vm530, 1.0, 0.0
    %v787 = vsel %vm531, 1.0, 0.0
    %v788 = vsel %vm532, 1.0, 0.0
    %v789 = vsel %vm533, 1.0, 0.0
    %v790 = vsel %vm534, 1.0, 0.0
    %v791 = vsel %vm535, 1.0, 0.0
    %v792 = vsel %vm536, 1.0, 0.0
    %v793 = vsel %vm537, 1.0, 0.0
    %v794 = vsel %vm538, 1.0, 0.0
    %v795 = vsel %vm539, 1.0, 0.0
    %v796 = vsel %vm540, 1.0, 0.0
    %v797 = vsel %vm541, 1.0, 0.0
    %v798 = vsel %vm542, 1.0, 0.0
    %v799 = vsel %vm543, 1.0, 0.0
    %v800 = vsel %vm544, 1.0, 0.0
    %v801 = vsel %vm545, 1.0, 0.0
    %v802 = vsel %vm546, 1.0, 0.0
    %v803 = vsel %vm547, 1.0, 0.0
    %v804 = vsel %vm548, 1.0, 0.0
    %v805 = vsel %vm549, 1.0, 0.0
    %v806 = vsel %vm550, 1.0, 0.0
    %v807 = vsel %vm551, 1.0, 0.0
    %v808 = vsel %vm552, 1.0, 0.0
    %v809 = vsel %vm553, 1.0, 0.0
    %v810 = vsel %vm554, 1.0, 0.0
    %v811 = vsel %vm555, 1.0, 0.0
    %v812 = vsel %vm556, 1.0, 0.0
    %v813 = vsel %vm557, 1.0, 0.0
    %v814 = vsel %vm558, 1.0, 0.0
    %v815 = vsel %vm559, 1.0, 0.0
    %v816 = vsel %vm560, 1.0, 0.0
    %v817 = vsel %vm561, 1.0, 0.0
    %v818 = vsel %vm562, 1.0, 0.0
    %v819 = vsel %vm563, 1.0, 0.0
    %v820 = vsel %vm564, 1.0, 0.0
    %v821 = vsel %vm565, 1.0, 0.0
    %v822 = vsel %vm566, 1.0, 0.0
    %v823 = vsel %vm567, 1.0, 0.0
    %v824 = vsel %vm568, 1.0, 0.0
    %v825 = vsel %vm569, 1.0, 0.0
    %v826 = vsel %vm570, 1.0, 0.0
    %v827 = vsel %vm571, 1.0, 0.0
    %v828 = vsel %vm572, 1.0, 0.0
    %v829 = vsel %vm573, 1.0, 0.0
    %v830 = vsel %vm574, 1.0, 0.0
    %v831 = vsel %vm575, 1.0, 0.0
    %v832 = vsel %vm576, 1.0, 0.0
    %v833 = vsel %vm577, 1.0, 0.0
    %v834 = vsel %vm578, 1.0, 0.0
    %v835 = vsel %vm579, 1.0, 0.0
    %v836 = vsel %vm580, 1.0, 0.0
    %v837 = vsel %vm581, 1.0, 0.0
    %v838 = vsel %vm582, 1.0, 0.0
    %v839 = vsel %vm583, 1.0, 0.0
    %v840 = vsel %vm584, 1.0, 0.0
    %v841 = vsel %vm585, 1.0, 0.0
    %v842 = vsel %vm586, 1.0, 0.0
    %v843 = vsel %vm587, 1.0, 0.0
    %v844 = vsel %vm588, 1.0, 0.0
    %v845 = vsel %vm589, 1.0, 0.0
    %v846 = vsel %vm590, 1.0, 0.0
    %v847 = vsel %vm591, 1.0, 0.0
    %v848 = vsel %vm592, 1.0, 0.0
    %v849 = vsel %vm593, 1.0, 0.0
    %v850 = vsel %vm594, 1.0, 0.0
    %v851 = vsel %vm595, 1.0, 0.0
    %v852 = vsel %vm596, 1.0, 0.0
    %v853 = vsel %vm597, 1.0, 0.0
    %v854 = vsel %vm598, 1.0, 0.0
    %v855 = vsel %vm599, 1.0, 0.0
    %v856 = vsel %vm600, 1.0, 0.0
    %v857 = vsel %vm601, 1.0, 0.0
    %v858 = vsel %vm602, 1.0, 0.0
    %v859 = vsel %vm603, 1.0, 0.0
    %v860 = vsel %vm604, 1.0, 0.0
    %v861 = vadd.f32 %v93, %v605
    %v862 = vadd.f32 %v94, %v606
    %v863 = vadd.f32 %v95, %v607
    %v864 = vadd.f32 %v96, %v608
    %v865 = vadd.f32 %v97, %v609
    %v866 = vadd.f32 %v98, %v610
    %v867 = vadd.f32 %v99, %v611
    %v868 = vadd.f32 %v100, %v612
    %v869 = vadd.f32 %v101, %v613
    %v870 = vadd.f32 %v102, %v614
    %v871 = vadd.f32 %v103, %v615
    %v872 = vadd.f32 %v104, %v616
    %v873 = vadd.f32 %v105, %v617
    %v874 = vadd.f32 %v106, %v618
    %v875 = vadd.f32 %v107, %v619
    %v876 = vadd.f32 %v108, %v620
    %v877 = vadd.f32 %v109, %v621
    %v878 = vadd.f32 %v110, %v622
    %v879 = vadd.f32 %v111, %v623
    %v880 = vadd.f32 %v112, %v624
    %v881 = vadd.f32 %v113, %v625
    %v882 = vadd.f32 %v114, %v626
    %v883 = vadd.f32 %v115, %v627
    %v884 = vadd.f32 %v116, %v628
    %v885 = vadd.f32 %v117, %v629
    %v886 = vadd.f32 %v118, %v630
    %v887 = vadd.f32 %v119, %v631
    %v888 = vadd.f32 %v120, %v632
    %v889 = vadd.f32 %v121, %v633
    %v890 = vadd.f32 %v122, %v634
    %v891 = vadd.f32 %v123, %v635
    %v892 = vadd.f32 %v124, %v636
    %v893 = vadd.f32 %v125, %v637
    %v894 = vadd.f32 %v126, %v638
    %v895 = vadd.f32 %v127, %v639
    %v896 = vadd.f32 %v128, %v640
    %v897 = vadd.f32 %v129, %v641
    %v898 = vadd.f32 %v130, %v642
    %v899 = vadd.f32 %v131, %v643
    %v900 = vadd.f32 %v132, %v644
    %v901 = vadd.f32 %v133, %v645
    %v902 = vadd.f32 %v134, %v646
    %v903 = vadd.f32 %v135, %v647
    %v904 = vadd.f32 %v136, %v648
    %v905 = vadd.f32 %v137, %v649
    %v906 = vadd.f32 %v138, %v650
    %v907 = vadd.f32 %v139, %v651
    %v908 = vadd.f32 %v140, %v652
    %v909 = vadd.f32 %v141, %v653
    %v910 = vadd.f32 %v142, %v654
    %v911 = vadd.f32 %v143, %v655
    %v912 = vadd.f32 %v144, %v656
    %v913 = vadd.f32 %v145, %v657
    %v914 = vadd.f32 %v146, %v658
    %v915 = vadd.f32 %v147, %v659
    %v916 = vadd.f32 %v148, %v660
    %v917 = vadd.f32 %v149, %v661
    %v918 = vadd.f32 %v150, %v662
    %v919 = vadd.f32 %v151, %v663
    %v920 = vadd.f32 %v152, %v664
    %v921 = vadd.f32 %v153, %v665
    %v922 = vadd.f32 %v154, %v666
    %v923 = vadd.f32 %v155, %v667
    %v924 = vadd.f32 %v156, %v668
    %v925 = vadd.f32 %v157, %v669
    %v926 = vadd.f32 %v158, %v670
    %v927 = vadd.f32 %v159, %v671
    %v928 = vadd.f32 %v160, %v672
    %v929 = vadd.f32 %v161, %v673
    %v930 = vadd.f32 %v162, %v674
    %v931 = vadd.f32 %v163, %v675
    %v932 = vadd.f32 %v164, %v676
    %v933 = vadd.f32 %v165, %v677
    %v934 = vadd.f32 %v166, %v678
    %v935 = vadd.f32 %v167, %v679
    %v936 = vadd.f32 %v168, %v680
    %v937 = vadd.f32 %v169, %v681
    %v938 = vadd.f32 %v170, %v682
    %v939 = vadd.f32 %v171, %v683
    %v940 = vadd.f32 %v172, %v684
    %v941 = vadd.f32 %v173, %v685
    %v942 = vadd.f32 %v174, %v686
    %v943 = vadd.f32 %v175, %v687
    %v944 = vadd.f32 %v176, %v688
    %v945 = vadd.f32 %v177, %v689
    %v946 = vadd.f32 %v178, %v690
    %v947 = vadd.f32 %v179, %v691
    %v948 = vadd.f32 %v180, %v692
    %v949 = vadd.f32 %v181, %v693
    %v950 = vadd.f32 %v182, %v694
    %v951 = vadd.f32 %v183, %v695
    %v952 = vadd.f32 %v184, %v696
    %v953 = vadd.f32 %v185, %v697
    %v954 = vadd.f32 %v186, %v698
    %v955 = vadd.f32 %v187, %v699
    %v956 = vadd.f32 %v188, %v700
    %v957 = vadd.f32 %v189, %v701
    %v958 = vadd.f32 %v190, %v702
    %v959 = vadd.f32 %v191, %v703
    %v960 = vadd.f32 %v192, %v704
    %v961 = vadd.f32 %v193, %v705
    %v962 = vadd.f32 %v194, %v706
    %v963 = vadd.f32 %v195, %v707
    %v964 = vadd.f32 %v196, %v708
    %v965 = vadd.f32 %v197, %v709
    %v966 = vadd.f32 %v198, %v710
    %v967 = vadd.f32 %v199, %v711
    %v968 = vadd.f32 %v200, %v712
    %v969 = vadd.f32 %v201, %v713
    %v970 = vadd.f32 %v202, %v714
    %v971 = vadd.f32 %v203, %v715
    %v972 = vadd.f32 %v204, %v716
    %v973 = vadd.f32 %v205, %v717
    %v974 = vadd.f32 %v206, %v718
    %v975 = vadd.f32 %v207, %v719
    %v976 = vadd.f32 %v208, %v720
    %v977 = vadd.f32 %v209, %v721
    %v978 = vadd.f32 %v210, %v722
    %v979 = vadd.f32 %v211, %v723
    %v980 = vadd.f32 %v212, %v724
    %v981 = vadd.f32 %v213, %v725
    %v982 = vadd.f32 %v214, %v726
    %v983 = vadd.f32 %v215, %v727
    %v984 = vadd.f32 %v216, %v728
    %v985 = vadd.f32 %v217, %v729
    %v986 = vadd.f32 %v218, %v730
    %v987 = vadd.f32 %v219, %v731
    %v988 = vadd.f32 %v220, %v732
    %v989 = vadd.f32 %v221, %v733
    %v990 = vadd.f32 %v222, %v734
    %v991 = vadd.f32 %v223, %v735
    %v992 = vadd.f32 %v224, %v736
    %v993 = vadd.f32 %v225, %v737
    %v994 = vadd.f32 %v226, %v738
    %v995 = vadd.f32 %v227, %v739
    %v996 = vadd.f32 %v228, %v740
    %v997 = vadd.f32 %v229, %v741
    %v998 = vadd.f32 %v230, %v742
    %v999 = vadd.f32 %v231, %v743
    %v1000 = vadd.f32 %v232, %v744
    %v1001 = vadd.f32 %v233, %v745
    %v1002 = vadd.f32 %v234, %v746
    %v1003 = vadd.f32 %v235, %v747
    %v1004 = vadd.f32 %v236, %v748
    %v1005 = vadd.f32 %v237, %v749
    %v1006 = vadd.f32 %v238, %v750
    %v1007 = vadd.f32 %v239, %v751
    %v1008 = vadd.f32 %v240, %v752
    %v1009 = vadd.f32 %v241, %v753
    %v1010 = vadd.f32 %v242, %v754
    %v1011 = vadd.f32 %v243, %v755
    %v1012 = vadd.f32 %v244, %v756
    %v1013 = vadd.f32 %v245, %v757
    %v1014 = vadd.f32 %v246, %v758
    %v1015 = vadd.f32 %v247, %v759
    %v1016 = vadd.f32 %v248, %v760
    %v1017 = vadd.f32 %v249, %v761
    %v1018 = vadd.f32 %v250, %v762
    %v1019 = vadd.f32 %v251, %v763
    %v1020 = vadd.f32 %v252, %v764
    %v1021 = vadd.f32 %v253, %v765
    %v1022 = vadd.f32 %v254, %v766
    %v1023 = vadd.f32 %v255, %v767
    %v1024 = vadd.f32 %v256, %v768
    %v1025 = vadd.f32 %v257, %v769
    %v1026 = vadd.f32 %v258, %v770
    %v1027 = vadd.f32 %v259, %v771
    %v1028 = vadd.f32 %v260, %v772
    %v1029 = vadd.f32 %v261, %v773
    %v1030 = vadd.f32 %v262, %v774
    %v1031 = vadd.f32 %v263, %v775
    %v1032 = vadd.f32 %v264, %v776
    %v1033 = vadd.f32 %v265, %v777
    %v1034 = vadd.f32 %v266, %v778
    %v1035 = vadd.f32 %v267, %v779
    %v1036 = vadd.f32 %v268, %v780
    %v1037 = vadd.f32 %v269, %v781
    %v1038 = vadd.f32 %v270, %v782
    %v1039 = vadd.f32 %v271, %v783
    %v1040 = vadd.f32 %v272, %v784
    %v1041 = vadd.f32 %v273, %v785
    %v1042 = vadd.f32 %v274, %v786
    %v1043 = vadd.f32 %v275, %v787
    %v1044 = vadd.f32 %v276, %v788
    %v1045 = vadd.f32 %v277, %v789
    %v1046 = vadd.f32 %v278, %v790
    %v1047 = vadd.f32 %v279, %v791
    %v1048 = vadd.f32 %v280, %v792
    %v1049 = vadd.f32 %v281, %v793
    %v1050 = vadd.f32 %v282, %v794
    %v1051 = vadd.f32 %v283, %v795
    %v1052 = vadd.f32 %v284, %v796
    %v1053 = vadd.f32 %v285, %v797
    %v1054 = vadd.f32 %v286, %v798
    %v1055 = vadd.f32 %v287, %v799
    %v1056 = vadd.f32 %v288, %v800
    %v1057 = vadd.f32 %v289, %v801
    %v1058 = vadd.f32 %v290, %v802
    %v1059 = vadd.f32 %v291, %v803
    %v1060 = vadd.f32 %v292, %v804
    %v1061 = vadd.f32 %v293, %v805
    %v1062 = vadd.f32 %v294, %v806
    %v1063 = vadd.f32 %v295, %v807
    %v1064 = vadd.f32 %v296, %v808
    %v1065 = vadd.f32 %v297, %v809
    %v1066 = vadd.f32 %v298, %v810
    %v1067 = vadd.f32 %v299, %v811
    %v1068 = vadd.f32 %v300, %v812
    %v1069 = vadd.f32 %v301, %v813
    %v1070 = vadd.f32 %v302, %v814
    %v1071 = vadd.f32 %v303, %v815
    %v1072 = vadd.f32 %v304, %v816
    %v1073 = vadd.f32 %v305, %v817
    %v1074 = vadd.f32 %v306, %v818
    %v1075 = vadd.f32 %v307, %v819
    %v1076 = vadd.f32 %v308, %v820
    %v1077 = vadd.f32 %v309, %v821
    %v1078 = vadd.f32 %v310, %v822
    %v1079 = vadd.f32 %v311, %v823
    %v1080 = vadd.f32 %v312, %v824
    %v1081 = vadd.f32 %v313, %v825
    %v1082 = vadd.f32 %v314, %v826
    %v1083 = vadd.f32 %v315, %v827
    %v1084 = vadd.f32 %v316, %v828
    %v1085 = vadd.f32 %v317, %v829
    %v1086 = vadd.f32 %v318, %v830
    %v1087 = vadd.f32 %v319, %v831
    %v1088 = vadd.f32 %v320, %v832
    %v1089 = vadd.f32 %v321, %v833
    %v1090 = vadd.f32 %v322, %v834
    %v1091 = vadd.f32 %v323, %v835
    %v1092 = vadd.f32 %v324, %v836
    %v1093 = vadd.f32 %v325, %v837
    %v1094 = vadd.f32 %v326, %v838
    %v1095 = vadd.f32 %v327, %v839
    %v1096 = vadd.f32 %v328, %v840
    %v1097 = vadd.f32 %v329, %v841
    %v1098 = vadd.f32 %v330, %v842
    %v1099 = vadd.f32 %v331, %v843
    %v1100 = vadd.f32 %v332, %v844
    %v1101 = vadd.f32 %v333, %v845
    %v1102 = vadd.f32 %v334, %v846
    %v1103 = vadd.f32 %v335, %v847
    %v1104 = vadd.f32 %v336, %v848
    %v1105 = vadd.f32 %v337, %v849
    %v1106 = vadd.f32 %v338, %v850
    %v1107 = vadd.f32 %v339, %v851
    %v1108 = vadd.f32 %v340, %v852
    %v1109 = vadd.f32 %v341, %v853
    %v1110 = vadd.f32 %v342, %v854
    %v1111 = vadd.f32 %v343, %v855
    %v1112 = vadd.f32 %v344, %v856
    %v1113 = vadd.f32 %v345, %v857
    %v1114 = vadd.f32 %v346, %v858
    %v1115 = vadd.f32 %v347, %v859
    %v1116 = vadd.f32 %v348, %v860
    %v1117 = vadd.f32 %v861, %v862
    %v1118 = vadd.f32 %v1117, %v863
    %v1119 = vadd.f32 %v1118, %v864
    %1120 = vadd.xlane.f32.xlu0 %v1119
    %v1121 = vpop.xlane.xlu0 %1120
    %v1122 = vadd.f32 %v865, %v866
    %v1123 = vadd.f32 %v1122, %v867
    %v1124 = vadd.f32 %v1123, %v868
    %1125 = vadd.xlane.f32.xlu0 %v1124
    %v1126 = vpop.xlane.xlu0 %1125
    %v1127 = vadd.f32 %v869, %v870
    %v1128 = vadd.f32 %v1127, %v871
    %v1129 = vadd.f32 %v1128, %v872
    %1130 = vadd.xlane.f32.xlu0 %v1129
    %v1131 = vpop.xlane.xlu0 %1130
    %v1132 = vadd.f32 %v873, %v874
    %v1133 = vadd.f32 %v1132, %v875
    %v1134 = vadd.f32 %v1133, %v876
    %1135 = vadd.xlane.f32.xlu0 %v1134
    %v1136 = vpop.xlane.xlu0 %1135
    %v1137 = vadd.f32 %v877, %v878
    %v1138 = vadd.f32 %v1137, %v879
    %v1139 = vadd.f32 %v1138, %v880
    %1140 = vadd.xlane.f32.xlu0 %v1139
    %v1141 = vpop.xlane.xlu0 %1140
    %v1142 = vadd.f32 %v881, %v882
    %v1143 = vadd.f32 %v1142, %v883
    %v1144 = vadd.f32 %v1143, %v884
    %1145 = vadd.xlane.f32.xlu0 %v1144
    %v1146 = vpop.xlane.xlu0 %1145
    %v1147 = vadd.f32 %v885, %v886
    %v1148 = vadd.f32 %v1147, %v887
    %v1149 = vadd.f32 %v1148, %v888
    %1150 = vadd.xlane.f32.xlu0 %v1149
    %v1151 = vpop.xlane.xlu0 %1150
    %v1152 = vadd.f32 %v889, %v890
    %v1153 = vadd.f32 %v1152, %v891
    %v1154 = vadd.f32 %v1153, %v892
    %1155 = vadd.xlane.f32.xlu0 %v1154
    %v1156 = vpop.xlane.xlu0 %1155
    %v1157 = vadd.f32 %v893, %v894
    %v1158 = vadd.f32 %v1157, %v895
    %v1159 = vadd.f32 %v1158, %v896
    %1160 = vadd.xlane.f32.xlu0 %v1159
    %v1161 = vpop.xlane.xlu0 %1160
    %v1162 = vadd.f32 %v897, %v898
    %v1163 = vadd.f32 %v1162, %v899
    %v1164 = vadd.f32 %v1163, %v900
    %1165 = vadd.xlane.f32.xlu0 %v1164
    %v1166 = vpop.xlane.xlu0 %1165
    %v1167 = vadd.f32 %v901, %v902
    %v1168 = vadd.f32 %v1167, %v903
    %v1169 = vadd.f32 %v1168, %v904
    %1170 = vadd.xlane.f32.xlu0 %v1169
    %v1171 = vpop.xlane.xlu0 %1170
    %v1172 = vadd.f32 %v905, %v906
    %v1173 = vadd.f32 %v1172, %v907
    %v1174 = vadd.f32 %v1173, %v908
    %1175 = vadd.xlane.f32.xlu0 %v1174
    %v1176 = vpop.xlane.xlu0 %1175
    %v1177 = vadd.f32 %v909, %v910
    %v1178 = vadd.f32 %v1177, %v911
    %v1179 = vadd.f32 %v1178, %v912
    %1180 = vadd.xlane.f32.xlu0 %v1179
    %v1181 = vpop.xlane.xlu0 %1180
    %v1182 = vadd.f32 %v913, %v914
    %v1183 = vadd.f32 %v1182, %v915
    %v1184 = vadd.f32 %v1183, %v916
    %1185 = vadd.xlane.f32.xlu0 %v1184
    %v1186 = vpop.xlane.xlu0 %1185
    %v1187 = vadd.f32 %v917, %v918
    %v1188 = vadd.f32 %v1187, %v919
    %v1189 = vadd.f32 %v1188, %v920
    %1190 = vadd.xlane.f32.xlu0 %v1189
    %v1191 = vpop.xlane.xlu0 %1190
    %v1192 = vadd.f32 %v921, %v922
    %v1193 = vadd.f32 %v1192, %v923
    %v1194 = vadd.f32 %v1193, %v924
    %1195 = vadd.xlane.f32.xlu0 %v1194
    %v1196 = vpop.xlane.xlu0 %1195
    %v1197 = vadd.f32 %v925, %v926
    %v1198 = vadd.f32 %v1197, %v927
    %v1199 = vadd.f32 %v1198, %v928
    %1200 = vadd.xlane.f32.xlu0 %v1199
    %v1201 = vpop.xlane.xlu0 %1200
    %v1202 = vadd.f32 %v929, %v930
    %v1203 = vadd.f32 %v1202, %v931
    %v1204 = vadd.f32 %v1203, %v932
    %1205 = vadd.xlane.f32.xlu0 %v1204
    %v1206 = vpop.xlane.xlu0 %1205
    %v1207 = vadd.f32 %v933, %v934
    %v1208 = vadd.f32 %v1207, %v935
    %v1209 = vadd.f32 %v1208, %v936
    %1210 = vadd.xlane.f32.xlu0 %v1209
    %v1211 = vpop.xlane.xlu0 %1210
    %v1212 = vadd.f32 %v937, %v938
    %v1213 = vadd.f32 %v1212, %v939
    %v1214 = vadd.f32 %v1213, %v940
    %1215 = vadd.xlane.f32.xlu0 %v1214
    %v1216 = vpop.xlane.xlu0 %1215
    %v1217 = vadd.f32 %v941, %v942
    %v1218 = vadd.f32 %v1217, %v943
    %v1219 = vadd.f32 %v1218, %v944
    %1220 = vadd.xlane.f32.xlu0 %v1219
    %v1221 = vpop.xlane.xlu0 %1220
    %v1222 = vadd.f32 %v945, %v946
    %v1223 = vadd.f32 %v1222, %v947
    %v1224 = vadd.f32 %v1223, %v948
    %1225 = vadd.xlane.f32.xlu0 %v1224
    %v1226 = vpop.xlane.xlu0 %1225
    %v1227 = vadd.f32 %v949, %v950
    %v1228 = vadd.f32 %v1227, %v951
    %v1229 = vadd.f32 %v1228, %v952
    %1230 = vadd.xlane.f32.xlu0 %v1229
    %v1231 = vpop.xlane.xlu0 %1230
    %v1232 = vadd.f32 %v953, %v954
    %v1233 = vadd.f32 %v1232, %v955
    %v1234 = vadd.f32 %v1233, %v956
    %1235 = vadd.xlane.f32.xlu0 %v1234
    %v1236 = vpop.xlane.xlu0 %1235
    %v1237 = vadd.f32 %v957, %v958
    %v1238 = vadd.f32 %v1237, %v959
    %v1239 = vadd.f32 %v1238, %v960
    %1240 = vadd.xlane.f32.xlu0 %v1239
    %v1241 = vpop.xlane.xlu0 %1240
    %v1242 = vadd.f32 %v961, %v962
    %v1243 = vadd.f32 %v1242, %v963
    %v1244 = vadd.f32 %v1243, %v964
    %1245 = vadd.xlane.f32.xlu0 %v1244
    %v1246 = vpop.xlane.xlu0 %1245
    %v1247 = vadd.f32 %v965, %v966
    %v1248 = vadd.f32 %v1247, %v967
    %v1249 = vadd.f32 %v1248, %v968
    %1250 = vadd.xlane.f32.xlu0 %v1249
    %v1251 = vpop.xlane.xlu0 %1250
    %v1252 = vadd.f32 %v969, %v970
    %v1253 = vadd.f32 %v1252, %v971
    %v1254 = vadd.f32 %v1253, %v972
    %1255 = vadd.xlane.f32.xlu0 %v1254
    %v1256 = vpop.xlane.xlu0 %1255
    %v1257 = vadd.f32 %v973, %v974
    %v1258 = vadd.f32 %v1257, %v975
    %v1259 = vadd.f32 %v1258, %v976
    %1260 = vadd.xlane.f32.xlu0 %v1259
    %v1261 = vpop.xlane.xlu0 %1260
    %v1262 = vadd.f32 %v977, %v978
    %v1263 = vadd.f32 %v1262, %v979
    %v1264 = vadd.f32 %v1263, %v980
    %1265 = vadd.xlane.f32.xlu0 %v1264
    %v1266 = vpop.xlane.xlu0 %1265
    %v1267 = vadd.f32 %v981, %v982
    %v1268 = vadd.f32 %v1267, %v983
    %v1269 = vadd.f32 %v1268, %v984
    %1270 = vadd.xlane.f32.xlu0 %v1269
    %v1271 = vpop.xlane.xlu0 %1270
    %v1272 = vadd.f32 %v985, %v986
    %v1273 = vadd.f32 %v1272, %v987
    %v1274 = vadd.f32 %v1273, %v988
    %1275 = vadd.xlane.f32.xlu0 %v1274
    %v1276 = vpop.xlane.xlu0 %1275
    %v1277 = vadd.f32 %v989, %v990
    %v1278 = vadd.f32 %v1277, %v991
    %v1279 = vadd.f32 %v1278, %v992
    %1280 = vadd.xlane.f32.xlu0 %v1279
    %v1281 = vpop.xlane.xlu0 %1280
    %v1282 = vadd.f32 %v993, %v994
    %v1283 = vadd.f32 %v1282, %v995
    %v1284 = vadd.f32 %v1283, %v996
    %1285 = vadd.xlane.f32.xlu0 %v1284
    %v1286 = vpop.xlane.xlu0 %1285
    %v1287 = vadd.f32 %v997, %v998
    %v1288 = vadd.f32 %v1287, %v999
    %v1289 = vadd.f32 %v1288, %v1000
    %1290 = vadd.xlane.f32.xlu0 %v1289
    %v1291 = vpop.xlane.xlu0 %1290
    %v1292 = vadd.f32 %v1001, %v1002
    %v1293 = vadd.f32 %v1292, %v1003
    %v1294 = vadd.f32 %v1293, %v1004
    %1295 = vadd.xlane.f32.xlu0 %v1294
    %v1296 = vpop.xlane.xlu0 %1295
    %v1297 = vadd.f32 %v1005, %v1006
    %v1298 = vadd.f32 %v1297, %v1007
    %v1299 = vadd.f32 %v1298, %v1008
    %1300 = vadd.xlane.f32.xlu0 %v1299
    %v1301 = vpop.xlane.xlu0 %1300
    %v1302 = vadd.f32 %v1009, %v1010
    %v1303 = vadd.f32 %v1302, %v1011
    %v1304 = vadd.f32 %v1303, %v1012
    %1305 = vadd.xlane.f32.xlu0 %v1304
    %v1306 = vpop.xlane.xlu0 %1305
    %v1307 = vadd.f32 %v1013, %v1014
    %v1308 = vadd.f32 %v1307, %v1015
    %v1309 = vadd.f32 %v1308, %v1016
    %1310 = vadd.xlane.f32.xlu0 %v1309
    %v1311 = vpop.xlane.xlu0 %1310
    %v1312 = vadd.f32 %v1017, %v1018
    %v1313 = vadd.f32 %v1312, %v1019
    %v1314 = vadd.f32 %v1313, %v1020
    %1315 = vadd.xlane.f32.xlu0 %v1314
    %v1316 = vpop.xlane.xlu0 %1315
    %v1317 = vadd.f32 %v1021, %v1022
    %v1318 = vadd.f32 %v1317, %v1023
    %v1319 = vadd.f32 %v1318, %v1024
    %1320 = vadd.xlane.f32.xlu0 %v1319
    %v1321 = vpop.xlane.xlu0 %1320
    %v1322 = vadd.f32 %v1025, %v1026
    %v1323 = vadd.f32 %v1322, %v1027
    %v1324 = vadd.f32 %v1323, %v1028
    %1325 = vadd.xlane.f32.xlu0 %v1324
    %v1326 = vpop.xlane.xlu0 %1325
    %v1327 = vadd.f32 %v1029, %v1030
    %v1328 = vadd.f32 %v1327, %v1031
    %v1329 = vadd.f32 %v1328, %v1032
    %1330 = vadd.xlane.f32.xlu0 %v1329
    %v1331 = vpop.xlane.xlu0 %1330
    %v1332 = vadd.f32 %v1033, %v1034
    %v1333 = vadd.f32 %v1332, %v1035
    %v1334 = vadd.f32 %v1333, %v1036
    %1335 = vadd.xlane.f32.xlu0 %v1334
    %v1336 = vpop.xlane.xlu0 %1335
    %v1337 = vadd.f32 %v1037, %v1038
    %v1338 = vadd.f32 %v1337, %v1039
    %v1339 = vadd.f32 %v1338, %v1040
    %1340 = vadd.xlane.f32.xlu0 %v1339
    %v1341 = vpop.xlane.xlu0 %1340
    %v1342 = vadd.f32 %v1041, %v1042
    %v1343 = vadd.f32 %v1342, %v1043
    %v1344 = vadd.f32 %v1343, %v1044
    %1345 = vadd.xlane.f32.xlu0 %v1344
    %v1346 = vpop.xlane.xlu0 %1345
    %v1347 = vadd.f32 %v1045, %v1046
    %v1348 = vadd.f32 %v1347, %v1047
    %v1349 = vadd.f32 %v1348, %v1048
    %1350 = vadd.xlane.f32.xlu0 %v1349
    %v1351 = vpop.xlane.xlu0 %1350
    %v1352 = vadd.f32 %v1049, %v1050
    %v1353 = vadd.f32 %v1352, %v1051
    %v1354 = vadd.f32 %v1353, %v1052
    %1355 = vadd.xlane.f32.xlu0 %v1354
    %v1356 = vpop.xlane.xlu0 %1355
    %v1357 = vadd.f32 %v1053, %v1054
    %v1358 = vadd.f32 %v1357, %v1055
    %v1359 = vadd.f32 %v1358, %v1056
    %1360 = vadd.xlane.f32.xlu0 %v1359
    %v1361 = vpop.xlane.xlu0 %1360
    %v1362 = vadd.f32 %v1057, %v1058
    %v1363 = vadd.f32 %v1362, %v1059
    %v1364 = vadd.f32 %v1363, %v1060
    %1365 = vadd.xlane.f32.xlu0 %v1364
    %v1366 = vpop.xlane.xlu0 %1365
    %v1367 = vadd.f32 %v1061, %v1062
    %v1368 = vadd.f32 %v1367, %v1063
    %v1369 = vadd.f32 %v1368, %v1064
    %1370 = vadd.xlane.f32.xlu0 %v1369
    %v1371 = vpop.xlane.xlu0 %1370
    %v1372 = vadd.f32 %v1065, %v1066
    %v1373 = vadd.f32 %v1372, %v1067
    %v1374 = vadd.f32 %v1373, %v1068
    %1375 = vadd.xlane.f32.xlu0 %v1374
    %v1376 = vpop.xlane.xlu0 %1375
    %v1377 = vadd.f32 %v1069, %v1070
    %v1378 = vadd.f32 %v1377, %v1071
    %v1379 = vadd.f32 %v1378, %v1072
    %1380 = vadd.xlane.f32.xlu0 %v1379
    %v1381 = vpop.xlane.xlu0 %1380
    %v1382 = vadd.f32 %v1073, %v1074
    %v1383 = vadd.f32 %v1382, %v1075
    %v1384 = vadd.f32 %v1383, %v1076
    %1385 = vadd.xlane.f32.xlu0 %v1384
    %v1386 = vpop.xlane.xlu0 %1385
    %v1387 = vadd.f32 %v1077, %v1078
    %v1388 = vadd.f32 %v1387, %v1079
    %v1389 = vadd.f32 %v1388, %v1080
    %1390 = vadd.xlane.f32.xlu0 %v1389
    %v1391 = vpop.xlane.xlu0 %1390
    %v1392 = vadd.f32 %v1081, %v1082
    %v1393 = vadd.f32 %v1392, %v1083
    %v1394 = vadd.f32 %v1393, %v1084
    %1395 = vadd.xlane.f32.xlu0 %v1394
    %v1396 = vpop.xlane.xlu0 %1395
    %v1397 = vadd.f32 %v1085, %v1086
    %v1398 = vadd.f32 %v1397, %v1087
    %v1399 = vadd.f32 %v1398, %v1088
    %1400 = vadd.xlane.f32.xlu0 %v1399
    %v1401 = vpop.xlane.xlu0 %1400
    %v1402 = vadd.f32 %v1089, %v1090
    %v1403 = vadd.f32 %v1402, %v1091
    %v1404 = vadd.f32 %v1403, %v1092
    %1405 = vadd.xlane.f32.xlu0 %v1404
    %v1406 = vpop.xlane.xlu0 %1405
    %v1407 = vadd.f32 %v1093, %v1094
    %v1408 = vadd.f32 %v1407, %v1095
    %v1409 = vadd.f32 %v1408, %v1096
    %1410 = vadd.xlane.f32.xlu0 %v1409
    %v1411 = vpop.xlane.xlu0 %1410
    %v1412 = vadd.f32 %v1097, %v1098
    %v1413 = vadd.f32 %v1412, %v1099
    %v1414 = vadd.f32 %v1413, %v1100
    %1415 = vadd.xlane.f32.xlu0 %v1414
    %v1416 = vpop.xlane.xlu0 %1415
    %v1417 = vadd.f32 %v1101, %v1102
    %v1418 = vadd.f32 %v1417, %v1103
    %v1419 = vadd.f32 %v1418, %v1104
    %1420 = vadd.xlane.f32.xlu0 %v1419
    %v1421 = vpop.xlane.xlu0 %1420
    %v1422 = vadd.f32 %v1105, %v1106
    %v1423 = vadd.f32 %v1422, %v1107
    %v1424 = vadd.f32 %v1423, %v1108
    %1425 = vadd.xlane.f32.xlu0 %v1424
    %v1426 = vpop.xlane.xlu0 %1425
    %v1427 = vadd.f32 %v1109, %v1110
    %v1428 = vadd.f32 %v1427, %v1111
    %v1429 = vadd.f32 %v1428, %v1112
    %1430 = vadd.xlane.f32.xlu0 %v1429
    %v1431 = vpop.xlane.xlu0 %1430
    %v1432 = vadd.f32 %v1113, %v1114
    %v1433 = vadd.f32 %v1432, %v1115
    %v1434 = vadd.f32 %v1433, %v1116
    %1435 = vadd.xlane.f32.xlu0 %v1434
    %v1436 = vpop.xlane.xlu0 %1435
    %vm1437 = vcmp.gt.f32.partialorder %v1121, 0.0
    %vm1438 = vcmp.gt.f32.partialorder %v1126, 0.0
    %vm1439 = vcmp.gt.f32.partialorder %v1131, 0.0
    %vm1440 = vcmp.gt.f32.partialorder %v1136, 0.0
    %vm1441 = vcmp.gt.f32.partialorder %v1141, 0.0
    %vm1442 = vcmp.gt.f32.partialorder %v1146, 0.0
    %vm1443 = vcmp.gt.f32.partialorder %v1151, 0.0
    %vm1444 = vcmp.gt.f32.partialorder %v1156, 0.0
    %vm1445 = vcmp.gt.f32.partialorder %v1161, 0.0
    %vm1446 = vcmp.gt.f32.partialorder %v1166, 0.0
    %vm1447 = vcmp.gt.f32.partialorder %v1171, 0.0
    %vm1448 = vcmp.gt.f32.partialorder %v1176, 0.0
    %vm1449 = vcmp.gt.f32.partialorder %v1181, 0.0
    %vm1450 = vcmp.gt.f32.partialorder %v1186, 0.0
    %vm1451 = vcmp.gt.f32.partialorder %v1191, 0.0
    %vm1452 = vcmp.gt.f32.partialorder %v1196, 0.0
    %vm1453 = vcmp.gt.f32.partialorder %v1201, 0.0
    %vm1454 = vcmp.gt.f32.partialorder %v1206, 0.0
    %vm1455 = vcmp.gt.f32.partialorder %v1211, 0.0
    %vm1456 = vcmp.gt.f32.partialorder %v1216, 0.0
    %vm1457 = vcmp.gt.f32.partialorder %v1221, 0.0
    %vm1458 = vcmp.gt.f32.partialorder %v1226, 0.0
    %vm1459 = vcmp.gt.f32.partialorder %v1231, 0.0
    %vm1460 = vcmp.gt.f32.partialorder %v1236, 0.0
    %vm1461 = vcmp.gt.f32.partialorder %v1241, 0.0
    %vm1462 = vcmp.gt.f32.partialorder %v1246, 0.0
    %vm1463 = vcmp.gt.f32.partialorder %v1251, 0.0
    %vm1464 = vcmp.gt.f32.partialorder %v1256, 0.0
    %vm1465 = vcmp.gt.f32.partialorder %v1261, 0.0
    %vm1466 = vcmp.gt.f32.partialorder %v1266, 0.0
    %vm1467 = vcmp.gt.f32.partialorder %v1271, 0.0
    %vm1468 = vcmp.gt.f32.partialorder %v1276, 0.0
    %vm1469 = vcmp.gt.f32.partialorder %v1281, 0.0
    %vm1470 = vcmp.gt.f32.partialorder %v1286, 0.0
    %vm1471 = vcmp.gt.f32.partialorder %v1291, 0.0
    %vm1472 = vcmp.gt.f32.partialorder %v1296, 0.0
    %vm1473 = vcmp.gt.f32.partialorder %v1301, 0.0
    %vm1474 = vcmp.gt.f32.partialorder %v1306, 0.0
    %vm1475 = vcmp.gt.f32.partialorder %v1311, 0.0
    %vm1476 = vcmp.gt.f32.partialorder %v1316, 0.0
    %vm1477 = vcmp.gt.f32.partialorder %v1321, 0.0
    %vm1478 = vcmp.gt.f32.partialorder %v1326, 0.0
    %vm1479 = vcmp.gt.f32.partialorder %v1331, 0.0
    %vm1480 = vcmp.gt.f32.partialorder %v1336, 0.0
    %vm1481 = vcmp.gt.f32.partialorder %v1341, 0.0
    %vm1482 = vcmp.gt.f32.partialorder %v1346, 0.0
    %vm1483 = vcmp.gt.f32.partialorder %v1351, 0.0
    %vm1484 = vcmp.gt.f32.partialorder %v1356, 0.0
    %vm1485 = vcmp.gt.f32.partialorder %v1361, 0.0
    %vm1486 = vcmp.gt.f32.partialorder %v1366, 0.0
    %vm1487 = vcmp.gt.f32.partialorder %v1371, 0.0
    %vm1488 = vcmp.gt.f32.partialorder %v1376, 0.0
    %vm1489 = vcmp.gt.f32.partialorder %v1381, 0.0
    %vm1490 = vcmp.gt.f32.partialorder %v1386, 0.0
    %vm1491 = vcmp.gt.f32.partialorder %v1391, 0.0
    %vm1492 = vcmp.gt.f32.partialorder %v1396, 0.0
    %vm1493 = vcmp.gt.f32.partialorder %v1401, 0.0
    %vm1494 = vcmp.gt.f32.partialorder %v1406, 0.0
    %vm1495 = vcmp.gt.f32.partialorder %v1411, 0.0
    %vm1496 = vcmp.gt.f32.partialorder %v1416, 0.0
    %vm1497 = vcmp.gt.f32.partialorder %v1421, 0.0
    %vm1498 = vcmp.gt.f32.partialorder %v1426, 0.0
    %vm1499 = vcmp.gt.f32.partialorder %v1431, 0.0
    %vm1500 = vcmp.gt.f32.partialorder %v1436, 0.0
    %v1501 = vrsqrt.pop %v1121
    %v1502 = vrsqrt.pop %v1126
    %v1503 = vrsqrt.pop %v1131
    %v1504 = vrsqrt.pop %v1136
    %v1505 = vrsqrt.pop %v1141
    %v1506 = vrsqrt.pop %v1146
    %v1507 = vrsqrt.pop %v1151
    %v1508 = vrsqrt.pop %v1156
    %v1509 = vrsqrt.pop %v1161
    %v1510 = vrsqrt.pop %v1166
    %v1511 = vrsqrt.pop %v1171
    %v1512 = vrsqrt.pop %v1176
    %v1513 = vrsqrt.pop %v1181
    %v1514 = vrsqrt.pop %v1186
    %v1515 = vrsqrt.pop %v1191
    %v1516 = vrsqrt.pop %v1196
    %v1517 = vrsqrt.pop %v1201
    %v1518 = vrsqrt.pop %v1206
    %v1519 = vrsqrt.pop %v1211
    %v1520 = vrsqrt.pop %v1216
    %v1521 = vrsqrt.pop %v1221
    %v1522 = vrsqrt.pop %v1226
    %v1523 = vrsqrt.pop %v1231
    %v1524 = vrsqrt.pop %v1236
    %v1525 = vrsqrt.pop %v1241
    %v1526 = vrsqrt.pop %v1246
    %v1527 = vrsqrt.pop %v1251
    %v1528 = vrsqrt.pop %v1256
    %v1529 = vrsqrt.pop %v1261
    %v1530 = vrsqrt.pop %v1266
    %v1531 = vrsqrt.pop %v1271
    %v1532 = vrsqrt.pop %v1276
    %v1533 = vrsqrt.pop %v1281
    %v1534 = vrsqrt.pop %v1286
    %v1535 = vrsqrt.pop %v1291
    %v1536 = vrsqrt.pop %v1296
    %v1537 = vrsqrt.pop %v1301
    %v1538 = vrsqrt.pop %v1306
    %v1539 = vrsqrt.pop %v1311
    %v1540 = vrsqrt.pop %v1316
    %v1541 = vrsqrt.pop %v1321
    %v1542 = vrsqrt.pop %v1326
    %v1543 = vrsqrt.pop %v1331
    %v1544 = vrsqrt.pop %v1336
    %v1545 = vrsqrt.pop %v1341
    %v1546 = vrsqrt.pop %v1346
    %v1547 = vrsqrt.pop %v1351
    %v1548 = vrsqrt.pop %v1356
    %v1549 = vrsqrt.pop %v1361
    %v1550 = vrsqrt.pop %v1366
    %v1551 = vrsqrt.pop %v1371
    %v1552 = vrsqrt.pop %v1376
    %v1553 = vrsqrt.pop %v1381
    %v1554 = vrsqrt.pop %v1386
    %v1555 = vrsqrt.pop %v1391
    %v1556 = vrsqrt.pop %v1396
    %v1557 = vrsqrt.pop %v1401
    %v1558 = vrsqrt.pop %v1406
    %v1559 = vrsqrt.pop %v1411
    %v1560 = vrsqrt.pop %v1416
    %v1561 = vrsqrt.pop %v1421
    %v1562 = vrsqrt.pop %v1426
    %v1563 = vrsqrt.pop %v1431
    %v1564 = vrsqrt.pop %v1436
    %v1565 = vsel %vm1437, %v1501, 0.0
    %v1566 = vsel %vm1438, %v1502, 0.0
    %v1567 = vsel %vm1439, %v1503, 0.0
    %v1568 = vsel %vm1440, %v1504, 0.0
    %v1569 = vsel %vm1441, %v1505, 0.0
    %v1570 = vsel %vm1442, %v1506, 0.0
    %v1571 = vsel %vm1443, %v1507, 0.0
    %v1572 = vsel %vm1444, %v1508, 0.0
    %v1573 = vsel %vm1445, %v1509, 0.0
    %v1574 = vsel %vm1446, %v1510, 0.0
    %v1575 = vsel %vm1447, %v1511, 0.0
    %v1576 = vsel %vm1448, %v1512, 0.0
    %v1577 = vsel %vm1449, %v1513, 0.0
    %v1578 = vsel %vm1450, %v1514, 0.0
    %v1579 = vsel %vm1451, %v1515, 0.0
    %v1580 = vsel %vm1452, %v1516, 0.0
    %v1581 = vsel %vm1453, %v1517, 0.0
    %v1582 = vsel %vm1454, %v1518, 0.0
    %v1583 = vsel %vm1455, %v1519, 0.0
    %v1584 = vsel %vm1456, %v1520, 0.0
    %v1585 = vsel %vm1457, %v1521, 0.0
    %v1586 = vsel %vm1458, %v1522, 0.0
    %v1587 = vsel %vm1459, %v1523, 0.0
    %v1588 = vsel %vm1460, %v1524, 0.0
    %v1589 = vsel %vm1461, %v1525, 0.0
    %v1590 = vsel %vm1462, %v1526, 0.0
    %v1591 = vsel %vm1463, %v1527, 0.0
    %v1592 = vsel %vm1464, %v1528, 0.0
    %v1593 = vsel %vm1465, %v1529, 0.0
    %v1594 = vsel %vm1466, %v1530, 0.0
    %v1595 = vsel %vm1467, %v1531, 0.0
    %v1596 = vsel %vm1468, %v1532, 0.0
    %v1597 = vsel %vm1469, %v1533, 0.0
    %v1598 = vsel %vm1470, %v1534, 0.0
    %v1599 = vsel %vm1471, %v1535, 0.0
    %v1600 = vsel %vm1472, %v1536, 0.0
    %v1601 = vsel %vm1473, %v1537, 0.0
    %v1602 = vsel %vm1474, %v1538, 0.0
    %v1603 = vsel %vm1475, %v1539, 0.0
    %v1604 = vsel %vm1476, %v1540, 0.0
    %v1605 = vsel %vm1477, %v1541, 0.0
    %v1606 = vsel %vm1478, %v1542, 0.0
    %v1607 = vsel %vm1479, %v1543, 0.0
    %v1608 = vsel %vm1480, %v1544, 0.0
    %v1609 = vsel %vm1481, %v1545, 0.0
    %v1610 = vsel %vm1482, %v1546, 0.0
    %v1611 = vsel %vm1483, %v1547, 0.0
    %v1612 = vsel %vm1484, %v1548, 0.0
    %v1613 = vsel %vm1485, %v1549, 0.0
    %v1614 = vsel %vm1486, %v1550, 0.0
    %v1615 = vsel %vm1487, %v1551, 0.0
    %v1616 = vsel %vm1488, %v1552, 0.0
    %v1617 = vsel %vm1489, %v1553, 0.0
    %v1618 = vsel %vm1490, %v1554, 0.0
    %v1619 = vsel %vm1491, %v1555, 0.0
    %v1620 = vsel %vm1492, %v1556, 0.0
    %v1621 = vsel %vm1493, %v1557, 0.0
    %v1622 = vsel %vm1494, %v1558, 0.0
    %v1623 = vsel %vm1495, %v1559, 0.0
    %v1624 = vsel %vm1496, %v1560, 0.0
    %v1625 = vsel %vm1497, %v1561, 0.0
    %v1626 = vsel %vm1498, %v1562, 0.0
    %v1627 = vsel %vm1499, %v1563, 0.0
    %v1628 = vsel %vm1500, %v1564, 0.0
    %1629 = vmatprep.subr.mxu0 %v862
    %1630 = vmatpush1.xpose.msra.mxu0 %v861
    %1631 = vmatprep.subr.mxu0 %v866
    %1632 = vmatpush1.xpose.msra.mxu0 %v865
    %1633 = vmatprep.subr.mxu0 %v870
    %1634 = vmatpush1.xpose.msra.mxu0 %v869
    %1635 = vmatprep.subr.mxu0 %v874
    %1636 = vmatpush1.xpose.msra.mxu0 %v873
    %1637 = vmatprep.subr.mxu0 %v878
    %1638 = vmatpush1.xpose.msra.mxu0 %v877
    %1639 = vmatprep.subr.mxu0 %v882
    %1640 = vmatpush1.xpose.msra.mxu0 %v881
    %1641 = vmatprep.subr.mxu0 %v886
    %1642 = vmatpush1.xpose.msra.mxu0 %v885
    %1643 = vmatprep.subr.mxu0 %v890
    %1644 = vmatpush1.xpose.msra.mxu0 %v889
    %1645 = vmatprep.subr.mxu0 %v894
    %1646 = vmatpush1.xpose.msra.mxu0 %v893
    %1647 = vmatprep.subr.mxu0 %v898
    %1648 = vmatpush1.xpose.msra.mxu0 %v897
    %1649 = vmatprep.subr.mxu0 %v902
    %1650 = vmatpush1.xpose.msra.mxu0 %v901
    %1651 = vmatprep.subr.mxu0 %v906
    %1652 = vmatpush1.xpose.msra.mxu0 %v905
    %1653 = vmatprep.subr.mxu0 %v910
    %1654 = vmatpush1.xpose.msra.mxu0 %v909
    %1655 = vmatprep.subr.mxu0 %v914
    %1656 = vmatpush1.xpose.msra.mxu0 %v913
    %1657 = vmatprep.subr.mxu0 %v918
    %1658 = vmatpush1.xpose.msra.mxu0 %v917
    %1659 = vmatprep.subr.mxu0 %v922
    %1660 = vmatpush1.xpose.msra.mxu0 %v921
    %1661 = vmatprep.subr.mxu0 %v926
    %1662 = vmatpush1.xpose.msra.mxu0 %v925
    %1663 = vmatprep.subr.mxu0 %v930
    %1664 = vmatpush1.xpose.msra.mxu0 %v929
    %1665 = vmatprep.subr.mxu0 %v934
    %1666 = vmatpush1.xpose.msra.mxu0 %v933
    %1667 = vmatprep.subr.mxu0 %v938
    %1668 = vmatpush1.xpose.msra.mxu0 %v937
    %1669 = vmatprep.subr.mxu0 %v942
    %1670 = vmatpush1.xpose.msra.mxu0 %v941
    %1671 = vmatprep.subr.mxu0 %v946
    %1672 = vmatpush1.xpose.msra.mxu0 %v945
    %1673 = vmatprep.subr.mxu0 %v950
    %1674 = vmatpush1.xpose.msra.mxu0 %v949
    %1675 = vmatprep.subr.mxu0 %v954
    %1676 = vmatpush1.xpose.msra.mxu0 %v953
    %1677 = vmatprep.subr.mxu0 %v958
    %1678 = vmatpush1.xpose.msra.mxu0 %v957
    %1679 = vmatprep.subr.mxu0 %v962
    %1680 = vmatpush1.xpose.msra.mxu0 %v961
    %1681 = vmatprep.subr.mxu0 %v966
    %1682 = vmatpush1.xpose.msra.mxu0 %v965
    %1683 = vmatprep.subr.mxu0 %v970
    %1684 = vmatpush1.xpose.msra.mxu0 %v969
    %1685 = vmatprep.subr.mxu0 %v974
    %1686 = vmatpush1.xpose.msra.mxu0 %v973
    %1687 = vmatprep.subr.mxu0 %v978
    %1688 = vmatpush1.xpose.msra.mxu0 %v977
    %1689 = vmatprep.subr.mxu0 %v982
    %1690 = vmatpush1.xpose.msra.mxu0 %v981
    %1691 = vmatprep.subr.mxu0 %v986
    %1692 = vmatpush1.xpose.msra.mxu0 %v985
    %1693 = vmatprep.mubr.f32.mxu0 1.0
    %1694 = vmatmul.mubr.f32.gmra.mrb[0].mxu0 1.0
    %v1695 = vpop.f32.mrb[0].mxu0
    %v1696 = vadd.f32 0.0, %v1695
    %v1697 = vpop.f32.mrb[0].mxu0
    %v1698 = vadd.f32 0.0, %v1697
    %1699 = vdwg.mxu0
    %1700 = vmatprep.subr.mxu0 %v864
    %1701 = vmatpush1.xpose.msra.mxu0 %v863
    %1702 = vmatprep.subr.mxu0 %v868
    %1703 = vmatpush1.xpose.msra.mxu0 %v867
    %1704 = vmatprep.subr.mxu0 %v872
    %1705 = vmatpush1.xpose.msra.mxu0 %v871
    %1706 = vmatprep.subr.mxu0 %v876
    %1707 = vmatpush1.xpose.msra.mxu0 %v875
    %1708 = vmatprep.subr.mxu0 %v880
    %1709 = vmatpush1.xpose.msra.mxu0 %v879
    %1710 = vmatprep.subr.mxu0 %v884
    %1711 = vmatpush1.xpose.msra.mxu0 %v883
    %1712 = vmatprep.subr.mxu0 %v888
    %1713 = vmatpush1.xpose.msra.mxu0 %v887
    %1714 = vmatprep.subr.mxu0 %v892
    %1715 = vmatpush1.xpose.msra.mxu0 %v891
    %1716 = vmatprep.subr.mxu0 %v896
    %1717 = vmatpush1.xpose.msra.mxu0 %v895
    %1718 = vmatprep.subr.mxu0 %v900
    %1719 = vmatpush1.xpose.msra.mxu0 %v899
    %1720 = vmatprep.subr.mxu0 %v904
    %1721 = vmatpush1.xpose.msra.mxu0 %v903
    %1722 = vmatprep.subr.mxu0 %v908
    %1723 = vmatpush1.xpose.msra.mxu0 %v907
    %1724 = vmatprep.subr.mxu0 %v912
    %1725 = vmatpush1.xpose.msra.mxu0 %v911
    %1726 = vmatprep.subr.mxu0 %v916
    %1727 = vmatpush1.xpose.msra.mxu0 %v915
    %1728 = vmatprep.subr.mxu0 %v920
    %1729 = vmatpush1.xpose.msra.mxu0 %v919
    %1730 = vmatprep.subr.mxu0 %v924
    %1731 = vmatpush1.xpose.msra.mxu0 %v923
    %1732 = vmatprep.subr.mxu0 %v928
    %1733 = vmatpush1.xpose.msra.mxu0 %v927
    %1734 = vmatprep.subr.mxu0 %v932
    %1735 = vmatpush1.xpose.msra.mxu0 %v931
    %1736 = vmatprep.subr.mxu0 %v936
    %1737 = vmatpush1.xpose.msra.mxu0 %v935
    %1738 = vmatprep.subr.mxu0 %v940
    %1739 = vmatpush1.xpose.msra.mxu0 %v939
    %1740 = vmatprep.subr.mxu0 %v944
    %1741 = vmatpush1.xpose.msra.mxu0 %v943
    %1742 = vmatprep.subr.mxu0 %v948
    %1743 = vmatpush1.xpose.msra.mxu0 %v947
    %1744 = vmatprep.subr.mxu0 %v952
    %1745 = vmatpush1.xpose.msra.mxu0 %v951
    %1746 = vmatprep.subr.mxu0 %v956
    %1747 = vmatpush1.xpose.msra.mxu0 %v955
    %1748 = vmatprep.subr.mxu0 %v960
    %1749 = vmatpush1.xpose.msra.mxu0 %v959
    %1750 = vmatprep.subr.mxu0 %v964
    %1751 = vmatpush1.xpose.msra.mxu0 %v963
    %1752 = vmatprep.subr.mxu0 %v968
    %1753 = vmatpush1.xpose.msra.mxu0 %v967
    %1754 = vmatprep.subr.mxu0 %v972
    %1755 = vmatpush1.xpose.msra.mxu0 %v971
    %1756 = vmatprep.subr.mxu0 %v976
    %1757 = vmatpush1.xpose.msra.mxu0 %v975
    %1758 = vmatprep.subr.mxu0 %v980
    %1759 = vmatpush1.xpose.msra.mxu0 %v979
    %1760 = vmatprep.subr.mxu0 %v984
    %1761 = vmatpush1.xpose.msra.mxu0 %v983
    %1762 = vmatprep.subr.mxu0 %v988
    %1763 = vmatpush1.xpose.msra.mxu0 %v987
    %1764 = vmatprep.mubr.f32.mxu0 1.0
    %1765 = vmatmul.mubr.f32.gmra.mrb[0].mxu0 1.0
    %v1766 = vpop.f32.mrb[0].mxu0
    %v1767 = vadd.f32 %v1696, %v1766
    %v1768 = vpop.f32.mrb[0].mxu0
    %v1769 = vadd.f32 %v1698, %v1768
    %1770 = vdwg.mxu0
    %1771 = vmatprep.subr.mxu0 %v990
    %1772 = vmatpush1.xpose.msra.mxu0 %v989
    %1773 = vmatprep.subr.mxu0 %v994
    %1774 = vmatpush1.xpose.msra.mxu0 %v993
    %1775 = vmatprep.subr.mxu0 %v998
    %1776 = vmatpush1.xpose.msra.mxu0 %v997
    %1777 = vmatprep.subr.mxu0 %v1002
    %1778 = vmatpush1.xpose.msra.mxu0 %v1001
    %1779 = vmatprep.subr.mxu0 %v1006
    %1780 = vmatpush1.xpose.msra.mxu0 %v1005
    %1781 = vmatprep.subr.mxu0 %v1010
    %1782 = vmatpush1.xpose.msra.mxu0 %v1009
    %1783 = vmatprep.subr.mxu0 %v1014
    %1784 = vmatpush1.xpose.msra.mxu0 %v1013
    %1785 = vmatprep.subr.mxu0 %v1018
    %1786 = vmatpush1.xpose.msra.mxu0 %v1017
    %1787 = vmatprep.subr.mxu0 %v1022
    %1788 = vmatpush1.xpose.msra.mxu0 %v1021
    %1789 = vmatprep.subr.mxu0 %v1026
    %1790 = vmatpush1.xpose.msra.mxu0 %v1025
    %1791 = vmatprep.subr.mxu0 %v1030
    %1792 = vmatpush1.xpose.msra.mxu0 %v1029
    %1793 = vmatprep.subr.mxu0 %v1034
    %1794 = vmatpush1.xpose.msra.mxu0 %v1033
    %1795 = vmatprep.subr.mxu0 %v1038
    %1796 = vmatpush1.xpose.msra.mxu0 %v1037
    %1797 = vmatprep.subr.mxu0 %v1042
    %1798 = vmatpush1.xpose.msra.mxu0 %v1041
    %1799 = vmatprep.subr.mxu0 %v1046
    %1800 = vmatpush1.xpose.msra.mxu0 %v1045
    %1801 = vmatprep.subr.mxu0 %v1050
    %1802 = vmatpush1.xpose.msra.mxu0 %v1049
    %1803 = vmatprep.subr.mxu0 %v1054
    %1804 = vmatpush1.xpose.msra.mxu0 %v1053
    %1805 = vmatprep.subr.mxu0 %v1058
    %1806 = vmatpush1.xpose.msra.mxu0 %v1057
    %1807 = vmatprep.subr.mxu0 %v1062
    %1808 = vmatpush1.xpose.msra.mxu0 %v1061
    %1809 = vmatprep.subr.mxu0 %v1066
    %1810 = vmatpush1.xpose.msra.mxu0 %v1065
    %1811 = vmatprep.subr.mxu0 %v1070
    %1812 = vmatpush1.xpose.msra.mxu0 %v1069
    %1813 = vmatprep.subr.mxu0 %v1074
    %1814 = vmatpush1.xpose.msra.mxu0 %v1073
    %1815 = vmatprep.subr.mxu0 %v1078
    %1816 = vmatpush1.xpose.msra.mxu0 %v1077
    %1817 = vmatprep.subr.mxu0 %v1082
    %1818 = vmatpush1.xpose.msra.mxu0 %v1081
    %1819 = vmatprep.subr.mxu0 %v1086
    %1820 = vmatpush1.xpose.msra.mxu0 %v1085
    %1821 = vmatprep.subr.mxu0 %v1090
    %1822 = vmatpush1.xpose.msra.mxu0 %v1089
    %1823 = vmatprep.subr.mxu0 %v1094
    %1824 = vmatpush1.xpose.msra.mxu0 %v1093
    %1825 = vmatprep.subr.mxu0 %v1098
    %1826 = vmatpush1.xpose.msra.mxu0 %v1097
    %1827 = vmatprep.subr.mxu0 %v1102
    %1828 = vmatpush1.xpose.msra.mxu0 %v1101
    %1829 = vmatprep.subr.mxu0 %v1106
    %1830 = vmatpush1.xpose.msra.mxu0 %v1105
    %1831 = vmatprep.subr.mxu0 %v1110
    %1832 = vmatpush1.xpose.msra.mxu0 %v1109
    %1833 = vmatprep.subr.mxu0 %v1114
    %1834 = vmatpush1.xpose.msra.mxu0 %v1113
    %1835 = vmatprep.mubr.f32.mxu0 1.0
    %1836 = vmatmul.mubr.f32.gmra.mrb[0].mxu0 1.0
    %v1837 = vpop.f32.mrb[0].mxu0
    %v1838 = vadd.f32 0.0, %v1837
    %v1839 = vpop.f32.mrb[0].mxu0
    %v1840 = vadd.f32 0.0, %v1839
    %1841 = vdwg.mxu0
    %1842 = vmatprep.subr.mxu0 %v992
    %1843 = vmatpush1.xpose.msra.mxu0 %v991
    %1844 = vmatprep.subr.mxu0 %v996
    %1845 = vmatpush1.xpose.msra.mxu0 %v995
    %1846 = vmatprep.subr.mxu0 %v1000
    %1847 = vmatpush1.xpose.msra.mxu0 %v999
    %1848 = vmatprep.subr.mxu0 %v1004
    %1849 = vmatpush1.xpose.msra.mxu0 %v1003
    %1850 = vmatprep.subr.mxu0 %v1008
    %1851 = vmatpush1.xpose.msra.mxu0 %v1007
    %1852 = vmatprep.subr.mxu0 %v1012
    %1853 = vmatpush1.xpose.msra.mxu0 %v1011
    %1854 = vmatprep.subr.mxu0 %v1016
    %1855 = vmatpush1.xpose.msra.mxu0 %v1015
    %1856 = vmatprep.subr.mxu0 %v1020
    %1857 = vmatpush1.xpose.msra.mxu0 %v1019
    %1858 = vmatprep.subr.mxu0 %v1024
    %1859 = vmatpush1.xpose.msra.mxu0 %v1023
    %1860 = vmatprep.subr.mxu0 %v1028
    %1861 = vmatpush1.xpose.msra.mxu0 %v1027
    %1862 = vmatprep.subr.mxu0 %v1032
    %1863 = vmatpush1.xpose.msra.mxu0 %v1031
    %1864 = vmatprep.subr.mxu0 %v1036
    %1865 = vmatpush1.xpose.msra.mxu0 %v1035
    %1866 = vmatprep.subr.mxu0 %v1040
    %1867 = vmatpush1.xpose.msra.mxu0 %v1039
    %1868 = vmatprep.subr.mxu0 %v1044
    %1869 = vmatpush1.xpose.msra.mxu0 %v1043
    %1870 = vmatprep.subr.mxu0 %v1048
    %1871 = vmatpush1.xpose.msra.mxu0 %v1047
    %1872 = vmatprep.subr.mxu0 %v1052
    %1873 = vmatpush1.xpose.msra.mxu0 %v1051
    %1874 = vmatprep.subr.mxu0 %v1056
    %1875 = vmatpush1.xpose.msra.mxu0 %v1055
    %1876 = vmatprep.subr.mxu0 %v1060
    %1877 = vmatpush1.xpose.msra.mxu0 %v1059
    %1878 = vmatprep.subr.mxu0 %v1064
    %1879 = vmatpush1.xpose.msra.mxu0 %v1063
    %1880 = vmatprep.subr.mxu0 %v1068
    %1881 = vmatpush1.xpose.msra.mxu0 %v1067
    %1882 = vmatprep.subr.mxu0 %v1072
    %1883 = vmatpush1.xpose.msra.mxu0 %v1071
    %1884 = vmatprep.subr.mxu0 %v1076
    %1885 = vmatpush1.xpose.msra.mxu0 %v1075
    %1886 = vmatprep.subr.mxu0 %v1080
    %1887 = vmatpush1.xpose.msra.mxu0 %v1079
    %1888 = vmatprep.subr.mxu0 %v1084
    %1889 = vmatpush1.xpose.msra.mxu0 %v1083
    %1890 = vmatprep.subr.mxu0 %v1088
    %1891 = vmatpush1.xpose.msra.mxu0 %v1087
    %1892 = vmatprep.subr.mxu0 %v1092
    %1893 = vmatpush1.xpose.msra.mxu0 %v1091
    %1894 = vmatprep.subr.mxu0 %v1096
    %1895 = vmatpush1.xpose.msra.mxu0 %v1095
    %1896 = vmatprep.subr.mxu0 %v1100
    %1897 = vmatpush1.xpose.msra.mxu0 %v1099
    %1898 = vmatprep.subr.mxu0 %v1104
    %1899 = vmatpush1.xpose.msra.mxu0 %v1103
    %1900 = vmatprep.subr.mxu0 %v1108
    %1901 = vmatpush1.xpose.msra.mxu0 %v1107
    %1902 = vmatprep.subr.mxu0 %v1112
    %1903 = vmatpush1.xpose.msra.mxu0 %v1111
    %1904 = vmatprep.subr.mxu0 %v1116
    %1905 = vmatpush1.xpose.msra.mxu0 %v1115
    %1906 = vmatprep.mubr.f32.mxu0 1.0
    %1907 = vmatmul.mubr.f32.gmra.mrb[0].mxu0 1.0
    %v1908 = vpop.f32.mrb[0].mxu0
    %v1909 = vadd.f32 %v1838, %v1908
    %v1910 = vpop.f32.mrb[0].mxu0
    %v1911 = vadd.f32 %v1840, %v1910
    %1912 = vdwg.mxu0
    %vm1913 = vcmp.gt.f32.partialorder %v1767, 0.0
    %vm1914 = vcmp.gt.f32.partialorder %v1769, 0.0
    %vm1915 = vcmp.gt.f32.partialorder %v1909, 0.0
    %vm1916 = vcmp.gt.f32.partialorder %v1911, 0.0
    %v1917 = vrsqrt.pop %v1767
    %v1918 = vrsqrt.pop %v1769
    %v1919 = vrsqrt.pop %v1909
    %v1920 = vrsqrt.pop %v1911
    %v1921 = vsel %vm1913, %v1917, 0.0
    %v1922 = vsel %vm1914, %v1918, 0.0
    %v1923 = vsel %vm1915, %v1919, 0.0
    %v1924 = vsel %vm1916, %v1920, 0.0
    %v1925 = vmul.f32 %v1565, %v861
    %v1926 = vmul.f32 %v1565, %v862
    %v1927 = vmul.f32 %v1565, %v863
    %v1928 = vmul.f32 %v1565, %v864
    %v1929 = vmul.f32 %v1566, %v865
    %v1930 = vmul.f32 %v1566, %v866
    %v1931 = vmul.f32 %v1566, %v867
    %v1932 = vmul.f32 %v1566, %v868
    %v1933 = vmul.f32 %v1567, %v869
    %v1934 = vmul.f32 %v1567, %v870
    %v1935 = vmul.f32 %v1567, %v871
    %v1936 = vmul.f32 %v1567, %v872
    %v1937 = vmul.f32 %v1568, %v873
    %v1938 = vmul.f32 %v1568, %v874
    %v1939 = vmul.f32 %v1568, %v875
    %v1940 = vmul.f32 %v1568, %v876
    %v1941 = vmul.f32 %v1569, %v877
    %v1942 = vmul.f32 %v1569, %v878
    %v1943 = vmul.f32 %v1569, %v879
    %v1944 = vmul.f32 %v1569, %v880
    %v1945 = vmul.f32 %v1570, %v881
    %v1946 = vmul.f32 %v1570, %v882
    %v1947 = vmul.f32 %v1570, %v883
    %v1948 = vmul.f32 %v1570, %v884
    %v1949 = vmul.f32 %v1571, %v885
    %v1950 = vmul.f32 %v1571, %v886
    %v1951 = vmul.f32 %v1571, %v887
    %v1952 = vmul.f32 %v1571, %v888
    %v1953 = vmul.f32 %v1572, %v889
    %v1954 = vmul.f32 %v1572, %v890
    %v1955 = vmul.f32 %v1572, %v891
    %v1956 = vmul.f32 %v1572, %v892
    %v1957 = vmul.f32 %v1573, %v893
    %v1958 = vmul.f32 %v1573, %v894
    %v1959 = vmul.f32 %v1573, %v895
    %v1960 = vmul.f32 %v1573, %v896
    %v1961 = vmul.f32 %v1574, %v897
    %v1962 = vmul.f32 %v1574, %v898
    %v1963 = vmul.f32 %v1574, %v899
    %v1964 = vmul.f32 %v1574, %v900
    %v1965 = vmul.f32 %v1575, %v901
    %v1966 = vmul.f32 %v1575, %v902
    %v1967 = vmul.f32 %v1575, %v903
    %v1968 = vmul.f32 %v1575, %v904
    %v1969 = vmul.f32 %v1576, %v905
    %v1970 = vmul.f32 %v1576, %v906
    %v1971 = vmul.f32 %v1576, %v907
    %v1972 = vmul.f32 %v1576, %v908
    %v1973 = vmul.f32 %v1577, %v909
    %v1974 = vmul.f32 %v1577, %v910
    %v1975 = vmul.f32 %v1577, %v911
    %v1976 = vmul.f32 %v1577, %v912
    %v1977 = vmul.f32 %v1578, %v913
    %v1978 = vmul.f32 %v1578, %v914
    %v1979 = vmul.f32 %v1578, %v915
    %v1980 = vmul.f32 %v1578, %v916
    %v1981 = vmul.f32 %v1579, %v917
    %v1982 = vmul.f32 %v1579, %v918
    %v1983 = vmul.f32 %v1579, %v919
    %v1984 = vmul.f32 %v1579, %v920
    %v1985 = vmul.f32 %v1580, %v921
    %v1986 = vmul.f32 %v1580, %v922
    %v1987 = vmul.f32 %v1580, %v923
    %v1988 = vmul.f32 %v1580, %v924
    %v1989 = vmul.f32 %v1581, %v925
    %v1990 = vmul.f32 %v1581, %v926
    %v1991 = vmul.f32 %v1581, %v927
    %v1992 = vmul.f32 %v1581, %v928
    %v1993 = vmul.f32 %v1582, %v929
    %v1994 = vmul.f32 %v1582, %v930
    %v1995 = vmul.f32 %v1582, %v931
    %v1996 = vmul.f32 %v1582, %v932
    %v1997 = vmul.f32 %v1583, %v933
    %v1998 = vmul.f32 %v1583, %v934
    %v1999 = vmul.f32 %v1583, %v935
    %v2000 = vmul.f32 %v1583, %v936
    %v2001 = vmul.f32 %v1584, %v937
    %v2002 = vmul.f32 %v1584, %v938
    %v2003 = vmul.f32 %v1584, %v939
    %v2004 = vmul.f32 %v1584, %v940
    %v2005 = vmul.f32 %v1585, %v941
    %v2006 = vmul.f32 %v1585, %v942
    %v2007 = vmul.f32 %v1585, %v943
    %v2008 = vmul.f32 %v1585, %v944
    %v2009 = vmul.f32 %v1586, %v945
    %v2010 = vmul.f32 %v1586, %v946
    %v2011 = vmul.f32 %v1586, %v947
    %v2012 = vmul.f32 %v1586, %v948
    %v2013 = vmul.f32 %v1587, %v949
    %v2014 = vmul.f32 %v1587, %v950
    %v2015 = vmul.f32 %v1587, %v951
    %v2016 = vmul.f32 %v1587, %v952
    %v2017 = vmul.f32 %v1588, %v953
    %v2018 = vmul.f32 %v1588, %v954
    %v2019 = vmul.f32 %v1588, %v955
    %v2020 = vmul.f32 %v1588, %v956
    %v2021 = vmul.f32 %v1589, %v957
    %v2022 = vmul.f32 %v1589, %v958
    %v2023 = vmul.f32 %v1589, %v959
    %v2024 = vmul.f32 %v1589, %v960
    %v2025 = vmul.f32 %v1590, %v961
    %v2026 = vmul.f32 %v1590, %v962
    %v2027 = vmul.f32 %v1590, %v963
    %v2028 = vmul.f32 %v1590, %v964
    %v2029 = vmul.f32 %v1591, %v965
    %v2030 = vmul.f32 %v1591, %v966
    %v2031 = vmul.f32 %v1591, %v967
    %v2032 = vmul.f32 %v1591, %v968
    %v2033 = vmul.f32 %v1592, %v969
    %v2034 = vmul.f32 %v1592, %v970
    %v2035 = vmul.f32 %v1592, %v971
    %v2036 = vmul.f32 %v1592, %v972
    %v2037 = vmul.f32 %v1593, %v973
    %v2038 = vmul.f32 %v1593, %v974
    %v2039 = vmul.f32 %v1593, %v975
    %v2040 = vmul.f32 %v1593, %v976
    %v2041 = vmul.f32 %v1594, %v977
    %v2042 = vmul.f32 %v1594, %v978
    %v2043 = vmul.f32 %v1594, %v979
    %v2044 = vmul.f32 %v1594, %v980
    %v2045 = vmul.f32 %v1595, %v981
    %v2046 = vmul.f32 %v1595, %v982
    %v2047 = vmul.f32 %v1595, %v983
    %v2048 = vmul.f32 %v1595, %v984
    %v2049 = vmul.f32 %v1596, %v985
    %v2050 = vmul.f32 %v1596, %v986
    %v2051 = vmul.f32 %v1596, %v987
    %v2052 = vmul.f32 %v1596, %v988
    %v2053 = vmul.f32 %v1597, %v989
    %v2054 = vmul.f32 %v1597, %v990
    %v2055 = vmul.f32 %v1597, %v991
    %v2056 = vmul.f32 %v1597, %v992
    %v2057 = vmul.f32 %v1598, %v993
    %v2058 = vmul.f32 %v1598, %v994
    %v2059 = vmul.f32 %v1598, %v995
    %v2060 = vmul.f32 %v1598, %v996
    %v2061 = vmul.f32 %v1599, %v997
    %v2062 = vmul.f32 %v1599, %v998
    %v2063 = vmul.f32 %v1599, %v999
    %v2064 = vmul.f32 %v1599, %v1000
    %v2065 = vmul.f32 %v1600, %v1001
    %v2066 = vmul.f32 %v1600, %v1002
    %v2067 = vmul.f32 %v1600, %v1003
    %v2068 = vmul.f32 %v1600, %v1004
    %v2069 = vmul.f32 %v1601, %v1005
    %v2070 = vmul.f32 %v1601, %v1006
    %v2071 = vmul.f32 %v1601, %v1007
    %v2072 = vmul.f32 %v1601, %v1008
    %v2073 = vmul.f32 %v1602, %v1009
    %v2074 = vmul.f32 %v1602, %v1010
    %v2075 = vmul.f32 %v1602, %v1011
    %v2076 = vmul.f32 %v1602, %v1012
    %v2077 = vmul.f32 %v1603, %v1013
    %v2078 = vmul.f32 %v1603, %v1014
    %v2079 = vmul.f32 %v1603, %v1015
    %v2080 = vmul.f32 %v1603, %v1016
    %v2081 = vmul.f32 %v1604, %v1017
    %v2082 = vmul.f32 %v1604, %v1018
    %v2083 = vmul.f32 %v1604, %v1019
    %v2084 = vmul.f32 %v1604, %v1020
    %v2085 = vmul.f32 %v1605, %v1021
    %v2086 = vmul.f32 %v1605, %v1022
    %v2087 = vmul.f32 %v1605, %v1023
    %v2088 = vmul.f32 %v1605, %v1024
    %v2089 = vmul.f32 %v1606, %v1025
    %v2090 = vmul.f32 %v1606, %v1026
    %v2091 = vmul.f32 %v1606, %v1027
    %v2092 = vmul.f32 %v1606, %v1028
    %v2093 = vmul.f32 %v1607, %v1029
    %v2094 = vmul.f32 %v1607, %v1030
    %v2095 = vmul.f32 %v1607, %v1031
    %v2096 = vmul.f32 %v1607, %v1032
    %v2097 = vmul.f32 %v1608, %v1033
    %v2098 = vmul.f32 %v1608, %v1034
    %v2099 = vmul.f32 %v1608, %v1035
    %v2100 = vmul.f32 %v1608, %v1036
    %v2101 = vmul.f32 %v1609, %v1037
    %v2102 = vmul.f32 %v1609, %v1038
    %v2103 = vmul.f32 %v1609, %v1039
    %v2104 = vmul.f32 %v1609, %v1040
    %v2105 = vmul.f32 %v1610, %v1041
    %v2106 = vmul.f32 %v1610, %v1042
    %v2107 = vmul.f32 %v1610, %v1043
    %v2108 = vmul.f32 %v1610, %v1044
    %v2109 = vmul.f32 %v1611, %v1045
    %v2110 = vmul.f32 %v1611, %v1046
    %v2111 = vmul.f32 %v1611, %v1047
    %v2112 = vmul.f32 %v1611, %v1048
    %v2113 = vmul.f32 %v1612, %v1049
    %v2114 = vmul.f32 %v1612, %v1050
    %v2115 = vmul.f32 %v1612, %v1051
    %v2116 = vmul.f32 %v1612, %v1052
    %v2117 = vmul.f32 %v1613, %v1053
    %v2118 = vmul.f32 %v1613, %v1054
    %v2119 = vmul.f32 %v1613, %v1055
    %v2120 = vmul.f32 %v1613, %v1056
    %v2121 = vmul.f32 %v1614, %v1057
    %v2122 = vmul.f32 %v1614, %v1058
    %v2123 = vmul.f32 %v1614, %v1059
    %v2124 = vmul.f32 %v1614, %v1060
    %v2125 = vmul.f32 %v1615, %v1061
    %v2126 = vmul.f32 %v1615, %v1062
    %v2127 = vmul.f32 %v1615, %v1063
    %v2128 = vmul.f32 %v1615, %v1064
    %v2129 = vmul.f32 %v1616, %v1065
    %v2130 = vmul.f32 %v1616, %v1066
    %v2131 = vmul.f32 %v1616, %v1067
    %v2132 = vmul.f32 %v1616, %v1068
    %v2133 = vmul.f32 %v1617, %v1069
    %v2134 = vmul.f32 %v1617, %v1070
    %v2135 = vmul.f32 %v1617, %v1071
    %v2136 = vmul.f32 %v1617, %v1072
    %v2137 = vmul.f32 %v1618, %v1073
    %v2138 = vmul.f32 %v1618, %v1074
    %v2139 = vmul.f32 %v1618, %v1075
    %v2140 = vmul.f32 %v1618, %v1076
    %v2141 = vmul.f32 %v1619, %v1077
    %v2142 = vmul.f32 %v1619, %v1078
    %v2143 = vmul.f32 %v1619, %v1079
    %v2144 = vmul.f32 %v1619, %v1080
    %v2145 = vmul.f32 %v1620, %v1081
    %v2146 = vmul.f32 %v1620, %v1082
    %v2147 = vmul.f32 %v1620, %v1083
    %v2148 = vmul.f32 %v1620, %v1084
    %v2149 = vmul.f32 %v1621, %v1085
    %v2150 = vmul.f32 %v1621, %v1086
    %v2151 = vmul.f32 %v1621, %v1087
    %v2152 = vmul.f32 %v1621, %v1088
    %v2153 = vmul.f32 %v1622, %v1089
    %v2154 = vmul.f32 %v1622, %v1090
    %v2155 = vmul.f32 %v1622, %v1091
    %v2156 = vmul.f32 %v1622, %v1092
    %v2157 = vmul.f32 %v1623, %v1093
    %v2158 = vmul.f32 %v1623, %v1094
    %v2159 = vmul.f32 %v1623, %v1095
    %v2160 = vmul.f32 %v1623, %v1096
    %v2161 = vmul.f32 %v1624, %v1097
    %v2162 = vmul.f32 %v1624, %v1098
    %v2163 = vmul.f32 %v1624, %v1099
    %v2164 = vmul.f32 %v1624, %v1100
    %v2165 = vmul.f32 %v1625, %v1101
    %v2166 = vmul.f32 %v1625, %v1102
    %v2167 = vmul.f32 %v1625, %v1103
    %v2168 = vmul.f32 %v1625, %v1104
    %v2169 = vmul.f32 %v1626, %v1105
    %v2170 = vmul.f32 %v1626, %v1106
    %v2171 = vmul.f32 %v1626, %v1107
    %v2172 = vmul.f32 %v1626, %v1108
    %v2173 = vmul.f32 %v1627, %v1109
    %v2174 = vmul.f32 %v1627, %v1110
    %v2175 = vmul.f32 %v1627, %v1111
    %v2176 = vmul.f32 %v1627, %v1112
    %v2177 = vmul.f32 %v1628, %v1113
    %v2178 = vmul.f32 %v1628, %v1114
    %v2179 = vmul.f32 %v1628, %v1115
    %v2180 = vmul.f32 %v1628, %v1116
    %v2181 = vlaneseq
    %v2182 = vshrl.u32 %v2181, 7
    %v2183 = vsub.s32 0, %v2182
    %v2184 = vrot.slane %v1921, %v2183
    %v2185 = vlaneseq
    %v2186 = vshrl.u32 %v2185, 7
    %v2187 = vsub.s32 0, %v2186
    %v2188 = vrot.slane %v1922, %v2187
    %v2189 = vlaneseq
    %v2190 = vshrl.u32 %v2189, 7
    %v2191 = vsub.s32 0, %v2190
    %v2192 = vrot.slane %v1923, %v2191
    %v2193 = vlaneseq
    %v2194 = vshrl.u32 %v2193, 7
    %v2195 = vsub.s32 0, %v2194
    %v2196 = vrot.slane %v1924, %v2195
    %v2197 = vmul.f32 %v1925, %v2184
    %v2198 = vmul.f32 %v1926, %v2188
    %v2199 = vmul.f32 %v1927, %v2192
    %v2200 = vmul.f32 %v1928, %v2196
    %v2201 = vmul.f32 %v1929, %v2184
    %v2202 = vmul.f32 %v1930, %v2188
    %v2203 = vmul.f32 %v1931, %v2192
    %v2204 = vmul.f32 %v1932, %v2196
    %v2205 = vmul.f32 %v1933, %v2184
    %v2206 = vmul.f32 %v1934, %v2188
    %v2207 = vmul.f32 %v1935, %v2192
    %v2208 = vmul.f32 %v1936, %v2196
    %v2209 = vmul.f32 %v1937, %v2184
    %v2210 = vmul.f32 %v1938, %v2188
    %v2211 = vmul.f32 %v1939, %v2192
    %v2212 = vmul.f32 %v1940, %v2196
    %v2213 = vmul.f32 %v1941, %v2184
    %v2214 = vmul.f32 %v1942, %v2188
    %v2215 = vmul.f32 %v1943, %v2192
    %v2216 = vmul.f32 %v1944, %v2196
    %v2217 = vmul.f32 %v1945, %v2184
    %v2218 = vmul.f32 %v1946, %v2188
    %v2219 = vmul.f32 %v1947, %v2192
    %v2220 = vmul.f32 %v1948, %v2196
    %v2221 = vmul.f32 %v1949, %v2184
    %v2222 = vmul.f32 %v1950, %v2188
    %v2223 = vmul.f32 %v1951, %v2192
    %v2224 = vmul.f32 %v1952, %v2196
    %v2225 = vmul.f32 %v1953, %v2184
    %v2226 = vmul.f32 %v1954, %v2188
    %v2227 = vmul.f32 %v1955, %v2192
    %v2228 = vmul.f32 %v1956, %v2196
    %v2229 = vmul.f32 %v1957, %v2184
    %v2230 = vmul.f32 %v1958, %v2188
    %v2231 = vmul.f32 %v1959, %v2192
    %v2232 = vmul.f32 %v1960, %v2196
    %v2233 = vmul.f32 %v1961, %v2184
    %v2234 = vmul.f32 %v1962, %v2188
    %v2235 = vmul.f32 %v1963, %v2192
    %v2236 = vmul.f32 %v1964, %v2196
    %v2237 = vmul.f32 %v1965, %v2184
    %v2238 = vmul.f32 %v1966, %v2188
    %v2239 = vmul.f32 %v1967, %v2192
    %v2240 = vmul.f32 %v1968, %v2196
    %v2241 = vmul.f32 %v1969, %v2184
    %v2242 = vmul.f32 %v1970, %v2188
    %v2243 = vmul.f32 %v1971, %v2192
    %v2244 = vmul.f32 %v1972, %v2196
    %v2245 = vmul.f32 %v1973, %v2184
    %v2246 = vmul.f32 %v1974, %v2188
    %v2247 = vmul.f32 %v1975, %v2192
    %v2248 = vmul.f32 %v1976, %v2196
    %v2249 = vmul.f32 %v1977, %v2184
    %v2250 = vmul.f32 %v1978, %v2188
    %v2251 = vmul.f32 %v1979, %v2192
    %v2252 = vmul.f32 %v1980, %v2196
    %v2253 = vmul.f32 %v1981, %v2184
    %v2254 = vmul.f32 %v1982, %v2188
    %v2255 = vmul.f32 %v1983, %v2192
    %v2256 = vmul.f32 %v1984, %v2196
    %v2257 = vmul.f32 %v1985, %v2184
    %v2258 = vmul.f32 %v1986, %v2188
    %v2259 = vmul.f32 %v1987, %v2192
    %v2260 = vmul.f32 %v1988, %v2196
    %v2261 = vmul.f32 %v1989, %v2184
    %v2262 = vmul.f32 %v1990, %v2188
    %v2263 = vmul.f32 %v1991, %v2192
    %v2264 = vmul.f32 %v1992, %v2196
    %v2265 = vmul.f32 %v1993, %v2184
    %v2266 = vmul.f32 %v1994, %v2188
    %v2267 = vmul.f32 %v1995, %v2192
    %v2268 = vmul.f32 %v1996, %v2196
    %v2269 = vmul.f32 %v1997, %v2184
    %v2270 = vmul.f32 %v1998, %v2188
    %v2271 = vmul.f32 %v1999, %v2192
    %v2272 = vmul.f32 %v2000, %v2196
    %v2273 = vmul.f32 %v2001, %v2184
    %v2274 = vmul.f32 %v2002, %v2188
    %v2275 = vmul.f32 %v2003, %v2192
    %v2276 = vmul.f32 %v2004, %v2196
    %v2277 = vmul.f32 %v2005, %v2184
    %v2278 = vmul.f32 %v2006, %v2188
    %v2279 = vmul.f32 %v2007, %v2192
    %v2280 = vmul.f32 %v2008, %v2196
    %v2281 = vmul.f32 %v2009, %v2184
    %v2282 = vmul.f32 %v2010, %v2188
    %v2283 = vmul.f32 %v2011, %v2192
    %v2284 = vmul.f32 %v2012, %v2196
    %v2285 = vmul.f32 %v2013, %v2184
    %v2286 = vmul.f32 %v2014, %v2188
    %v2287 = vmul.f32 %v2015, %v2192
    %v2288 = vmul.f32 %v2016, %v2196
    %v2289 = vmul.f32 %v2017, %v2184
    %v2290 = vmul.f32 %v2018, %v2188
    %v2291 = vmul.f32 %v2019, %v2192
    %v2292 = vmul.f32 %v2020, %v2196
    %v2293 = vmul.f32 %v2021, %v2184
    %v2294 = vmul.f32 %v2022, %v2188
    %v2295 = vmul.f32 %v2023, %v2192
    %v2296 = vmul.f32 %v2024, %v2196
    %v2297 = vmul.f32 %v2025, %v2184
    %v2298 = vmul.f32 %v2026, %v2188
    %v2299 = vmul.f32 %v2027, %v2192
    %v2300 = vmul.f32 %v2028, %v2196
    %v2301 = vmul.f32 %v2029, %v2184
    %v2302 = vmul.f32 %v2030, %v2188
    %v2303 = vmul.f32 %v2031, %v2192
    %v2304 = vmul.f32 %v2032, %v2196
    %v2305 = vmul.f32 %v2033, %v2184
    %v2306 = vmul.f32 %v2034, %v2188
    %v2307 = vmul.f32 %v2035, %v2192
    %v2308 = vmul.f32 %v2036, %v2196
    %v2309 = vmul.f32 %v2037, %v2184
    %v2310 = vmul.f32 %v2038, %v2188
    %v2311 = vmul.f32 %v2039, %v2192
    %v2312 = vmul.f32 %v2040, %v2196
    %v2313 = vmul.f32 %v2041, %v2184
    %v2314 = vmul.f32 %v2042, %v2188
    %v2315 = vmul.f32 %v2043, %v2192
    %v2316 = vmul.f32 %v2044, %v2196
    %v2317 = vmul.f32 %v2045, %v2184
    %v2318 = vmul.f32 %v2046, %v2188
    %v2319 = vmul.f32 %v2047, %v2192
    %v2320 = vmul.f32 %v2048, %v2196
    %v2321 = vmul.f32 %v2049, %v2184
    %v2322 = vmul.f32 %v2050, %v2188
    %v2323 = vmul.f32 %v2051, %v2192
    %v2324 = vmul.f32 %v2052, %v2196
    %v2325 = vmul.f32 %v2053, %v2184
    %v2326 = vmul.f32 %v2054, %v2188
    %v2327 = vmul.f32 %v2055, %v2192
    %v2328 = vmul.f32 %v2056, %v2196
    %v2329 = vmul.f32 %v2057, %v2184
    %v2330 = vmul.f32 %v2058, %v2188
    %v2331 = vmul.f32 %v2059, %v2192
    %v2332 = vmul.f32 %v2060, %v2196
    %v2333 = vmul.f32 %v2061, %v2184
    %v2334 = vmul.f32 %v2062, %v2188
    %v2335 = vmul.f32 %v2063, %v2192
    %v2336 = vmul.f32 %v2064, %v2196
    %v2337 = vmul.f32 %v2065, %v2184
    %v2338 = vmul.f32 %v2066, %v2188
    %v2339 = vmul.f32 %v2067, %v2192
    %v2340 = vmul.f32 %v2068, %v2196
    %v2341 = vmul.f32 %v2069, %v2184
    %v2342 = vmul.f32 %v2070, %v2188
    %v2343 = vmul.f32 %v2071, %v2192
    %v2344 = vmul.f32 %v2072, %v2196
    %v2345 = vmul.f32 %v2073, %v2184
    %v2346 = vmul.f32 %v2074, %v2188
    %v2347 = vmul.f32 %v2075, %v2192
    %v2348 = vmul.f32 %v2076, %v2196
    %v2349 = vmul.f32 %v2077, %v2184
    %v2350 = vmul.f32 %v2078, %v2188
    %v2351 = vmul.f32 %v2079, %v2192
    %v2352 = vmul.f32 %v2080, %v2196
    %v2353 = vmul.f32 %v2081, %v2184
    %v2354 = vmul.f32 %v2082, %v2188
    %v2355 = vmul.f32 %v2083, %v2192
    %v2356 = vmul.f32 %v2084, %v2196
    %v2357 = vmul.f32 %v2085, %v2184
    %v2358 = vmul.f32 %v2086, %v2188
    %v2359 = vmul.f32 %v2087, %v2192
    %v2360 = vmul.f32 %v2088, %v2196
    %v2361 = vmul.f32 %v2089, %v2184
    %v2362 = vmul.f32 %v2090, %v2188
    %v2363 = vmul.f32 %v2091, %v2192
    %v2364 = vmul.f32 %v2092, %v2196
    %v2365 = vmul.f32 %v2093, %v2184
    %v2366 = vmul.f32 %v2094, %v2188
    %v2367 = vmul.f32 %v2095, %v2192
    %v2368 = vmul.f32 %v2096, %v2196
    %v2369 = vmul.f32 %v2097, %v2184
    %v2370 = vmul.f32 %v2098, %v2188
    %v2371 = vmul.f32 %v2099, %v2192
    %v2372 = vmul.f32 %v2100, %v2196
    %v2373 = vmul.f32 %v2101, %v2184
    %v2374 = vmul.f32 %v2102, %v2188
    %v2375 = vmul.f32 %v2103, %v2192
    %v2376 = vmul.f32 %v2104, %v2196
    %v2377 = vmul.f32 %v2105, %v2184
    %v2378 = vmul.f32 %v2106, %v2188
    %v2379 = vmul.f32 %v2107, %v2192
    %v2380 = vmul.f32 %v2108, %v2196
    %v2381 = vmul.f32 %v2109, %v2184
    %v2382 = vmul.f32 %v2110, %v2188
    %v2383 = vmul.f32 %v2111, %v2192
    %v2384 = vmul.f32 %v2112, %v2196
    %v2385 = vmul.f32 %v2113, %v2184
    %v2386 = vmul.f32 %v2114, %v2188
    %v2387 = vmul.f32 %v2115, %v2192
    %v2388 = vmul.f32 %v2116, %v2196
    %v2389 = vmul.f32 %v2117, %v2184
    %v2390 = vmul.f32 %v2118, %v2188
    %v2391 = vmul.f32 %v2119, %v2192
    %v2392 = vmul.f32 %v2120, %v2196
    %v2393 = vmul.f32 %v2121, %v2184
    %v2394 = vmul.f32 %v2122, %v2188
    %v2395 = vmul.f32 %v2123, %v2192
    %v2396 = vmul.f32 %v2124, %v2196
    %v2397 = vmul.f32 %v2125, %v2184
    %v2398 = vmul.f32 %v2126, %v2188
    %v2399 = vmul.f32 %v2127, %v2192
    %v2400 = vmul.f32 %v2128, %v2196
    %v2401 = vmul.f32 %v2129, %v2184
    %v2402 = vmul.f32 %v2130, %v2188
    %v2403 = vmul.f32 %v2131, %v2192
    %v2404 = vmul.f32 %v2132, %v2196
    %v2405 = vmul.f32 %v2133, %v2184
    %v2406 = vmul.f32 %v2134, %v2188
    %v2407 = vmul.f32 %v2135, %v2192
    %v2408 = vmul.f32 %v2136, %v2196
    %v2409 = vmul.f32 %v2137, %v2184
    %v2410 = vmul.f32 %v2138, %v2188
    %v2411 = vmul.f32 %v2139, %v2192
    %v2412 = vmul.f32 %v2140, %v2196
    %v2413 = vmul.f32 %v2141, %v2184
    %v2414 = vmul.f32 %v2142, %v2188
    %v2415 = vmul.f32 %v2143, %v2192
    %v2416 = vmul.f32 %v2144, %v2196
    %v2417 = vmul.f32 %v2145, %v2184
    %v2418 = vmul.f32 %v2146, %v2188
    %v2419 = vmul.f32 %v2147, %v2192
    %v2420 = vmul.f32 %v2148, %v2196
    %v2421 = vmul.f32 %v2149, %v2184
    %v2422 = vmul.f32 %v2150, %v2188
    %v2423 = vmul.f32 %v2151, %v2192
    %v2424 = vmul.f32 %v2152, %v2196
    %v2425 = vmul.f32 %v2153, %v2184
    %v2426 = vmul.f32 %v2154, %v2188
    %v2427 = vmul.f32 %v2155, %v2192
    %v2428 = vmul.f32 %v2156, %v2196
    %v2429 = vmul.f32 %v2157, %v2184
    %v2430 = vmul.f32 %v2158, %v2188
    %v2431 = vmul.f32 %v2159, %v2192
    %v2432 = vmul.f32 %v2160, %v2196
    %v2433 = vmul.f32 %v2161, %v2184
    %v2434 = vmul.f32 %v2162, %v2188
    %v2435 = vmul.f32 %v2163, %v2192
    %v2436 = vmul.f32 %v2164, %v2196
    %v2437 = vmul.f32 %v2165, %v2184
    %v2438 = vmul.f32 %v2166, %v2188
    %v2439 = vmul.f32 %v2167, %v2192
    %v2440 = vmul.f32 %v2168, %v2196
    %v2441 = vmul.f32 %v2169, %v2184
    %v2442 = vmul.f32 %v2170, %v2188
    %v2443 = vmul.f32 %v2171, %v2192
    %v2444 = vmul.f32 %v2172, %v2196
    %v2445 = vmul.f32 %v2173, %v2184
    %v2446 = vmul.f32 %v2174, %v2188
    %v2447 = vmul.f32 %v2175, %v2192
    %v2448 = vmul.f32 %v2176, %v2196
    %v2449 = vmul.f32 %v2177, %v2184
    %v2450 = vmul.f32 %v2178, %v2188
    %v2451 = vmul.f32 %v2179, %v2192
    %v2452 = vmul.f32 %v2180, %v2196
    %2453 = vst [vmem:[#allocation5] sm:$0xff] %v2197
    %2454 = vst [vmem:[#allocation5 + $0x8] sm:$0xff] %v2198
    %2455 = vst [vmem:[#allocation5 + $0x10] sm:$0xff] %v2199
    %2456 = vst [vmem:[#allocation5 + $0x18] sm:$0xff] %v2200
    %2457 = vst [vmem:[#allocation5 + $0x20] sm:$0xff] %v2201
    %2458 = vst [vmem:[#allocation5 + $0x28] sm:$0xff] %v2202
    %2459 = vst [vmem:[#allocation5 + $0x30] sm:$0xff] %v2203
    %2460 = vst [vmem:[#allocation5 + $0x38] sm:$0xff] %v2204
    %2461 = vst [vmem:[#allocation5 + $0x40] sm:$0xff] %v2205
    %2462 = vst [vmem:[#allocation5 + $0x48] sm:$0xff] %v2206
    %2463 = vst [vmem:[#allocation5 + $0x50] sm:$0xff] %v2207
    %2464 = vst [vmem:[#allocation5 + $0x58] sm:$0xff] %v2208
    %2465 = vst [vmem:[#allocation5 + $0x60] sm:$0xff] %v2209
    %2466 = vst [vmem:[#allocation5 + $0x68] sm:$0xff] %v2210
    %2467 = vst [vmem:[#allocation5 + $0x70] sm:$0xff] %v2211
    %2468 = vst [vmem:[#allocation5 + $0x78] sm:$0xff] %v2212
    %2469 = vst [vmem:[#allocation5 + $0x80] sm:$0xff] %v2213
    %2470 = vst [vmem:[#allocation5 + $0x88] sm:$0xff] %v2214
    %2471 = vst [vmem:[#allocation5 + $0x90] sm:$0xff] %v2215
    %2472 = vst [vmem:[#allocation5 + $0x98] sm:$0xff] %v2216
    %2473 = vst [vmem:[#allocation5 + $0xa0] sm:$0xff] %v2217
    %2474 = vst [vmem:[#allocation5 + $0xa8] sm:$0xff] %v2218
    %2475 = vst [vmem:[#allocation5 + $0xb0] sm:$0xff] %v2219
    %2476 = vst [vmem:[#allocation5 + $0xb8] sm:$0xff] %v2220
    %2477 = vst [vmem:[#allocation5 + $0xc0] sm:$0xff] %v2221
    %2478 = vst [vmem:[#allocation5 + $0xc8] sm:$0xff] %v2222
    %2479 = vst [vmem:[#allocation5 + $0xd0] sm:$0xff] %v2223
    %2480 = vst [vmem:[#allocation5 + $0xd8] sm:$0xff] %v2224
    %2481 = vst [vmem:[#allocation5 + $0xe0] sm:$0xff] %v2225
    %2482 = vst [vmem:[#allocation5 + $0xe8] sm:$0xff] %v2226
    %2483 = vst [vmem:[#allocation5 + $0xf0] sm:$0xff] %v2227
    %2484 = vst [vmem:[#allocation5 + $0xf8] sm:$0xff] %v2228
    %2485 = vst [vmem:[#allocation5 + $0x100] sm:$0xff] %v2229
    %2486 = vst [vmem:[#allocation5 + $0x108] sm:$0xff] %v2230
    %2487 = vst [vmem:[#allocation5 + $0x110] sm:$0xff] %v2231
    %2488 = vst [vmem:[#allocation5 + $0x118] sm:$0xff] %v2232
    %2489 = vst [vmem:[#allocation5 + $0x120] sm:$0xff] %v2233
    %2490 = vst [vmem:[#allocation5 + $0x128] sm:$0xff] %v2234
    %2491 = vst [vmem:[#allocation5 + $0x130] sm:$0xff] %v2235
    %2492 = vst [vmem:[#allocation5 + $0x138] sm:$0xff] %v2236
    %2493 = vst [vmem:[#allocation5 + $0x140] sm:$0xff] %v2237
    %2494 = vst [vmem:[#allocation5 + $0x148] sm:$0xff] %v2238
    %2495 = vst [vmem:[#allocation5 + $0x150] sm:$0xff] %v2239
    %2496 = vst [vmem:[#allocation5 + $0x158] sm:$0xff] %v2240
    %2497 = vst [vmem:[#allocation5 + $0x160] sm:$0xff] %v2241
    %2498 = vst [vmem:[#allocation5 + $0x168] sm:$0xff] %v2242
    %2499 = vst [vmem:[#allocation5 + $0x170] sm:$0xff] %v2243
    %2500 = vst [vmem:[#allocation5 + $0x178] sm:$0xff] %v2244
    %2501 = vst [vmem:[#allocation5 + $0x180] sm:$0xff] %v2245
    %2502 = vst [vmem:[#allocation5 + $0x188] sm:$0xff] %v2246
    %2503 = vst [vmem:[#allocation5 + $0x190] sm:$0xff] %v2247
    %2504 = vst [vmem:[#allocation5 + $0x198] sm:$0xff] %v2248
    %2505 = vst [vmem:[#allocation5 + $0x1a0] sm:$0xff] %v2249
    %2506 = vst [vmem:[#allocation5 + $0x1a8] sm:$0xff] %v2250
    %2507 = vst [vmem:[#allocation5 + $0x1b0] sm:$0xff] %v2251
    %2508 = vst [vmem:[#allocation5 + $0x1b8] sm:$0xff] %v2252
    %2509 = vst [vmem:[#allocation5 + $0x1c0] sm:$0xff] %v2253
    %2510 = vst [vmem:[#allocation5 + $0x1c8] sm:$0xff] %v2254
    %2511 = vst [vmem:[#allocation5 + $0x1d0] sm:$0xff] %v2255
    %2512 = vst [vmem:[#allocation5 + $0x1d8] sm:$0xff] %v2256
    %2513 = vst [vmem:[#allocation5 + $0x1e0] sm:$0xff] %v2257
    %2514 = vst [vmem:[#allocation5 + $0x1e8] sm:$0xff] %v2258
    %2515 = vst [vmem:[#allocation5 + $0x1f0] sm:$0xff] %v2259
    %2516 = vst [vmem:[#allocation5 + $0x1f8] sm:$0xff] %v2260
    %2517 = vst [vmem:[#allocation5 + $0x200] sm:$0xff] %v2261
    %2518 = vst [vmem:[#allocation5 + $0x208] sm:$0xff] %v2262
    %2519 = vst [vmem:[#allocation5 + $0x210] sm:$0xff] %v2263
    %2520 = vst [vmem:[#allocation5 + $0x218] sm:$0xff] %v2264
    %2521 = vst [vmem:[#allocation5 + $0x220] sm:$0xff] %v2265
    %2522 = vst [vmem:[#allocation5 + $0x228] sm:$0xff] %v2266
    %2523 = vst [vmem:[#allocation5 + $0x230] sm:$0xff] %v2267
    %2524 = vst [vmem:[#allocation5 + $0x238] sm:$0xff] %v2268
    %2525 = vst [vmem:[#allocation5 + $0x240] sm:$0xff] %v2269
    %2526 = vst [vmem:[#allocation5 + $0x248] sm:$0xff] %v2270
    %2527 = vst [vmem:[#allocation5 + $0x250] sm:$0xff] %v2271
    %2528 = vst [vmem:[#allocation5 + $0x258] sm:$0xff] %v2272
    %2529 = vst [vmem:[#allocation5 + $0x260] sm:$0xff] %v2273
    %2530 = vst [vmem:[#allocation5 + $0x268] sm:$0xff] %v2274
    %2531 = vst [vmem:[#allocation5 + $0x270] sm:$0xff] %v2275
    %2532 = vst [vmem:[#allocation5 + $0x278] sm:$0xff] %v2276
    %2533 = vst [vmem:[#allocation5 + $0x280] sm:$0xff] %v2277
    %2534 = vst [vmem:[#allocation5 + $0x288] sm:$0xff] %v2278
    %2535 = vst [vmem:[#allocation5 + $0x290] sm:$0xff] %v2279
    %2536 = vst [vmem:[#allocation5 + $0x298] sm:$0xff] %v2280
    %2537 = vst [vmem:[#allocation5 + $0x2a0] sm:$0xff] %v2281
    %2538 = vst [vmem:[#allocation5 + $0x2a8] sm:$0xff] %v2282
    %2539 = vst [vmem:[#allocation5 + $0x2b0] sm:$0xff] %v2283
    %2540 = vst [vmem:[#allocation5 + $0x2b8] sm:$0xff] %v2284
    %2541 = vst [vmem:[#allocation5 + $0x2c0] sm:$0xff] %v2285
    %2542 = vst [vmem:[#allocation5 + $0x2c8] sm:$0xff] %v2286
    %2543 = vst [vmem:[#allocation5 + $0x2d0] sm:$0xff] %v2287
    %2544 = vst [vmem:[#allocation5 + $0x2d8] sm:$0xff] %v2288
    %2545 = vst [vmem:[#allocation5 + $0x2e0] sm:$0xff] %v2289
    %2546 = vst [vmem:[#allocation5 + $0x2e8] sm:$0xff] %v2290
    %2547 = vst [vmem:[#allocation5 + $0x2f0] sm:$0xff] %v2291
    %2548 = vst [vmem:[#allocation5 + $0x2f8] sm:$0xff] %v2292
    %2549 = vst [vmem:[#allocation5 + $0x300] sm:$0xff] %v2293
    %2550 = vst [vmem:[#allocation5 + $0x308] sm:$0xff] %v2294
    %2551 = vst [vmem:[#allocation5 + $0x310] sm:$0xff] %v2295
    %2552 = vst [vmem:[#allocation5 + $0x318] sm:$0xff] %v2296
    %2553 = vst [vmem:[#allocation5 + $0x320] sm:$0xff] %v2297
    %2554 = vst [vmem:[#allocation5 + $0x328] sm:$0xff] %v2298
    %2555 = vst [vmem:[#allocation5 + $0x330] sm:$0xff] %v2299
    %2556 = vst [vmem:[#allocation5 + $0x338] sm:$0xff] %v2300
    %2557 = vst [vmem:[#allocation5 + $0x340] sm:$0xff] %v2301
    %2558 = vst [vmem:[#allocation5 + $0x348] sm:$0xff] %v2302
    %2559 = vst [vmem:[#allocation5 + $0x350] sm:$0xff] %v2303
    %2560 = vst [vmem:[#allocation5 + $0x358] sm:$0xff] %v2304
    %2561 = vst [vmem:[#allocation5 + $0x360] sm:$0xff] %v2305
    %2562 = vst [vmem:[#allocation5 + $0x368] sm:$0xff] %v2306
    %2563 = vst [vmem:[#allocation5 + $0x370] sm:$0xff] %v2307
    %2564 = vst [vmem:[#allocation5 + $0x378] sm:$0xff] %v2308
    %2565 = vst [vmem:[#allocation5 + $0x380] sm:$0xff] %v2309
    %2566 = vst [vmem:[#allocation5 + $0x388] sm:$0xff] %v2310
    %2567 = vst [vmem:[#allocation5 + $0x390] sm:$0xff] %v2311
    %2568 = vst [vmem:[#allocation5 + $0x398] sm:$0xff] %v2312
    %2569 = vst [vmem:[#allocation5 + $0x3a0] sm:$0xff] %v2313
    %2570 = vst [vmem:[#allocation5 + $0x3a8] sm:$0xff] %v2314
    %2571 = vst [vmem:[#allocation5 + $0x3b0] sm:$0xff] %v2315
    %2572 = vst [vmem:[#allocation5 + $0x3b8] sm:$0xff] %v2316
    %2573 = vst [vmem:[#allocation5 + $0x3c0] sm:$0xff] %v2317
    %2574 = vst [vmem:[#allocation5 + $0x3c8] sm:$0xff] %v2318
    %2575 = vst [vmem:[#allocation5 + $0x3d0] sm:$0xff] %v2319
    %2576 = vst [vmem:[#allocation5 + $0x3d8] sm:$0xff] %v2320
    %2577 = vst [vmem:[#allocation5 + $0x3e0] sm:$0xff] %v2321
    %2578 = vst [vmem:[#allocation5 + $0x3e8] sm:$0xff] %v2322
    %2579 = vst [vmem:[#allocation5 + $0x3f0] sm:$0xff] %v2323
    %2580 = vst [vmem:[#allocation5 + $0x3f8] sm:$0xff] %v2324
    %2581 = vst [vmem:[#allocation5 + $0x400] sm:$0xff] %v2325
    %2582 = vst [vmem:[#allocation5 + $0x408] sm:$0xff] %v2326
    %2583 = vst [vmem:[#allocation5 + $0x410] sm:$0xff] %v2327
    %2584 = vst [vmem:[#allocation5 + $0x418] sm:$0xff] %v2328
    %2585 = vst [vmem:[#allocation5 + $0x420] sm:$0xff] %v2329
    %2586 = vst [vmem:[#allocation5 + $0x428] sm:$0xff] %v2330
    %2587 = vst [vmem:[#allocation5 + $0x430] sm:$0xff] %v2331
    %2588 = vst [vmem:[#allocation5 + $0x438] sm:$0xff] %v2332
    %2589 = vst [vmem:[#allocation5 + $0x440] sm:$0xff] %v2333
    %2590 = vst [vmem:[#allocation5 + $0x448] sm:$0xff] %v2334
    %2591 = vst [vmem:[#allocation5 + $0x450] sm:$0xff] %v2335
    %2592 = vst [vmem:[#allocation5 + $0x458] sm:$0xff] %v2336
    %2593 = vst [vmem:[#allocation5 + $0x460] sm:$0xff] %v2337
    %2594 = vst [vmem:[#allocation5 + $0x468] sm:$0xff] %v2338
    %2595 = vst [vmem:[#allocation5 + $0x470] sm:$0xff] %v2339
    %2596 = vst [vmem:[#allocation5 + $0x478] sm:$0xff] %v2340
    %2597 = vst [vmem:[#allocation5 + $0x480] sm:$0xff] %v2341
    %2598 = vst [vmem:[#allocation5 + $0x488] sm:$0xff] %v2342
    %2599 = vst [vmem:[#allocation5 + $0x490] sm:$0xff] %v2343
    %2600 = vst [vmem:[#allocation5 + $0x498] sm:$0xff] %v2344
    %2601 = vst [vmem:[#allocation5 + $0x4a0] sm:$0xff] %v2345
    %2602 = vst [vmem:[#allocation5 + $0x4a8] sm:$0xff] %v2346
    %2603 = vst [vmem:[#allocation5 + $0x4b0] sm:$0xff] %v2347
    %2604 = vst [vmem:[#allocation5 + $0x4b8] sm:$0xff] %v2348
    %2605 = vst [vmem:[#allocation5 + $0x4c0] sm:$0xff] %v2349
    %2606 = vst [vmem:[#allocation5 + $0x4c8] sm:$0xff] %v2350
    %2607 = vst [vmem:[#allocation5 + $0x4d0] sm:$0xff] %v2351
    %2608 = vst [vmem:[#allocation5 + $0x4d8] sm:$0xff] %v2352
    %2609 = vst [vmem:[#allocation5 + $0x4e0] sm:$0xff] %v2353
    %2610 = vst [vmem:[#allocation5 + $0x4e8] sm:$0xff] %v2354
    %2611 = vst [vmem:[#allocation5 + $0x4f0] sm:$0xff] %v2355
    %2612 = vst [vmem:[#allocation5 + $0x4f8] sm:$0xff] %v2356
    %2613 = vst [vmem:[#allocation5 + $0x500] sm:$0xff] %v2357
    %2614 = vst [vmem:[#allocation5 + $0x508] sm:$0xff] %v2358
    %2615 = vst [vmem:[#allocation5 + $0x510] sm:$0xff] %v2359
    %2616 = vst [vmem:[#allocation5 + $0x518] sm:$0xff] %v2360
    %2617 = vst [vmem:[#allocation5 + $0x520] sm:$0xff] %v2361
    %2618 = vst [vmem:[#allocation5 + $0x528] sm:$0xff] %v2362
    %2619 = vst [vmem:[#allocation5 + $0x530] sm:$0xff] %v2363
    %2620 = vst [vmem:[#allocation5 + $0x538] sm:$0xff] %v2364
    %2621 = vst [vmem:[#allocation5 + $0x540] sm:$0xff] %v2365
    %2622 = vst [vmem:[#allocation5 + $0x548] sm:$0xff] %v2366
    %2623 = vst [vmem:[#allocation5 + $0x550] sm:$0xff] %v2367
    %2624 = vst [vmem:[#allocation5 + $0x558] sm:$0xff] %v2368
    %2625 = vst [vmem:[#allocation5 + $0x560] sm:$0xff] %v2369
    %2626 = vst [vmem:[#allocation5 + $0x568] sm:$0xff] %v2370
    %2627 = vst [vmem:[#allocation5 + $0x570] sm:$0xff] %v2371
    %2628 = vst [vmem:[#allocation5 + $0x578] sm:$0xff] %v2372
    %2629 = vst [vmem:[#allocation5 + $0x580] sm:$0xff] %v2373
    %2630 = vst [vmem:[#allocation5 + $0x588] sm:$0xff] %v2374
    %2631 = vst [vmem:[#allocation5 + $0x590] sm:$0xff] %v2375
    %2632 = vst [vmem:[#allocation5 + $0x598] sm:$0xff] %v2376
    %2633 = vst [vmem:[#allocation5 + $0x5a0] sm:$0xff] %v2377
    %2634 = vst [vmem:[#allocation5 + $0x5a8] sm:$0xff] %v2378
    %2635 = vst [vmem:[#allocation5 + $0x5b0] sm:$0xff] %v2379
    %2636 = vst [vmem:[#allocation5 + $0x5b8] sm:$0xff] %v2380
    %2637 = vst [vmem:[#allocation5 + $0x5c0] sm:$0xff] %v2381
    %2638 = vst [vmem:[#allocation5 + $0x5c8] sm:$0xff] %v2382
    %2639 = vst [vmem:[#allocation5 + $0x5d0] sm:$0xff] %v2383
    %2640 = vst [vmem:[#allocation5 + $0x5d8] sm:$0xff] %v2384
    %2641 = vst [vmem:[#allocation5 + $0x5e0] sm:$0xff] %v2385
    %2642 = vst [vmem:[#allocation5 + $0x5e8] sm:$0xff] %v2386
    %2643 = vst [vmem:[#allocation5 + $0x5f0] sm:$0xff] %v2387
    %2644 = vst [vmem:[#allocation5 + $0x5f8] sm:$0xff] %v2388
    %2645 = vst [vmem:[#allocation5 + $0x600] sm:$0xff] %v2389
    %2646 = vst [vmem:[#allocation5 + $0x608] sm:$0xff] %v2390
    %2647 = vst [vmem:[#allocation5 + $0x610] sm:$0xff] %v2391
    %2648 = vst [vmem:[#allocation5 + $0x618] sm:$0xff] %v2392
    %2649 = vst [vmem:[#allocation5 + $0x620] sm:$0xff] %v2393
    %2650 = vst [vmem:[#allocation5 + $0x628] sm:$0xff] %v2394
    %2651 = vst [vmem:[#allocation5 + $0x630] sm:$0xff] %v2395
    %2652 = vst [vmem:[#allocation5 + $0x638] sm:$0xff] %v2396
    %2653 = vst [vmem:[#allocation5 + $0x640] sm:$0xff] %v2397
    %2654 = vst [vmem:[#allocation5 + $0x648] sm:$0xff] %v2398
    %2655 = vst [vmem:[#allocation5 + $0x650] sm:$0xff] %v2399
    %2656 = vst [vmem:[#allocation5 + $0x658] sm:$0xff] %v2400
    %2657 = vst [vmem:[#allocation5 + $0x660] sm:$0xff] %v2401
    %2658 = vst [vmem:[#allocation5 + $0x668] sm:$0xff] %v2402
    %2659 = vst [vmem:[#allocation5 + $0x670] sm:$0xff] %v2403
    %2660 = vst [vmem:[#allocation5 + $0x678] sm:$0xff] %v2404
    %2661 = vst [vmem:[#allocation5 + $0x680] sm:$0xff] %v2405
    %2662 = vst [vmem:[#allocation5 + $0x688] sm:$0xff] %v2406
    %2663 = vst [vmem:[#allocation5 + $0x690] sm:$0xff] %v2407
    %2664 = vst [vmem:[#allocation5 + $0x698] sm:$0xff] %v2408
    %2665 = vst [vmem:[#allocation5 + $0x6a0] sm:$0xff] %v2409
    %2666 = vst [vmem:[#allocation5 + $0x6a8] sm:$0xff] %v2410
    %2667 = vst [vmem:[#allocation5 + $0x6b0] sm:$0xff] %v2411
    %2668 = vst [vmem:[#allocation5 + $0x6b8] sm:$0xff] %v2412
    %2669 = vst [vmem:[#allocation5 + $0x6c0] sm:$0xff] %v2413
    %2670 = vst [vmem:[#allocation5 + $0x6c8] sm:$0xff] %v2414
    %2671 = vst [vmem:[#allocation5 + $0x6d0] sm:$0xff] %v2415
    %2672 = vst [vmem:[#allocation5 + $0x6d8] sm:$0xff] %v2416
    %2673 = vst [vmem:[#allocation5 + $0x6e0] sm:$0xff] %v2417
    %2674 = vst [vmem:[#allocation5 + $0x6e8] sm:$0xff] %v2418
    %2675 = vst [vmem:[#allocation5 + $0x6f0] sm:$0xff] %v2419
    %2676 = vst [vmem:[#allocation5 + $0x6f8] sm:$0xff] %v2420
    %2677 = vst [vmem:[#allocation5 + $0x700] sm:$0xff] %v2421
    %2678 = vst [vmem:[#allocation5 + $0x708] sm:$0xff] %v2422
    %2679 = vst [vmem:[#allocation5 + $0x710] sm:$0xff] %v2423
    %2680 = vst [vmem:[#allocation5 + $0x718] sm:$0xff] %v2424
    %2681 = vst [vmem:[#allocation5 + $0x720] sm:$0xff] %v2425
    %2682 = vst [vmem:[#allocation5 + $0x728] sm:$0xff] %v2426
    %2683 = vst [vmem:[#allocation5 + $0x730] sm:$0xff] %v2427
    %2684 = vst [vmem:[#allocation5 + $0x738] sm:$0xff] %v2428
    %2685 = vst [vmem:[#allocation5 + $0x740] sm:$0xff] %v2429
    %2686 = vst [vmem:[#allocation5 + $0x748] sm:$0xff] %v2430
    %2687 = vst [vmem:[#allocation5 + $0x750] sm:$0xff] %v2431
    %2688 = vst [vmem:[#allocation5 + $0x758] sm:$0xff] %v2432
    %2689 = vst [vmem:[#allocation5 + $0x760] sm:$0xff] %v2433
    %2690 = vst [vmem:[#allocation5 + $0x768] sm:$0xff] %v2434
    %2691 = vst [vmem:[#allocation5 + $0x770] sm:$0xff] %v2435
    %2692 = vst [vmem:[#allocation5 + $0x778] sm:$0xff] %v2436
    %2693 = vst [vmem:[#allocation5 + $0x780] sm:$0xff] %v2437
    %2694 = vst [vmem:[#allocation5 + $0x788] sm:$0xff] %v2438
    %2695 = vst [vmem:[#allocation5 + $0x790] sm:$0xff] %v2439
    %2696 = vst [vmem:[#allocation5 + $0x798] sm:$0xff] %v2440
    %2697 = vst [vmem:[#allocation5 + $0x7a0] sm:$0xff] %v2441
    %2698 = vst [vmem:[#allocation5 + $0x7a8] sm:$0xff] %v2442
    %2699 = vst [vmem:[#allocation5 + $0x7b0] sm:$0xff] %v2443
    %2700 = vst [vmem:[#allocation5 + $0x7b8] sm:$0xff] %v2444
    %2701 = vst [vmem:[#allocation5 + $0x7c0] sm:$0xff] %v2445
    %2702 = vst [vmem:[#allocation5 + $0x7c8] sm:$0xff] %v2446
    %2703 = vst [vmem:[#allocation5 + $0x7d0] sm:$0xff] %v2447
    %2704 = vst [vmem:[#allocation5 + $0x7d8] sm:$0xff] %v2448
    %2705 = vst [vmem:[#allocation5 + $0x7e0] sm:$0xff] %v2449
    %2706 = vst [vmem:[#allocation5 + $0x7e8] sm:$0xff] %v2450
    %2707 = vst [vmem:[#allocation5 + $0x7f0] sm:$0xff] %v2451
    %2708 = vst [vmem:[#allocation5 + $0x7f8] sm:$0xff] %v2452
    // Predicated region
    $region10: #{tpu_custom_call.1} parent=1 // pred_check
      _
    $region11: #{tpu_custom_call.1} parent=1 // pred_check_branch
      %2710 = sbr.rel (0) target = $region13
    $region12: #{tpu_custom_call.1} parent=1 // pred_region
      %s2712 = ssub.s32 32768, 32768
      %2713 = vsyncadd [#allocation4], %s2712
      %s2714 = sshll.u32 [#allocation5], 4
      %s2715 = int_to_ptr.vmem [resolvable:$true] %s2714
      %2720 = dma.vmem_to_hbm [thread:$0]  %s2715, 32768, %s1, [#allocation4], 512, 512, 32
    $region13: #{tpu_custom_call.1} parent=1 // pred_fallthru
      _
    // Predicated region
    $region14: #{tpu_custom_call.1} parent=1 // pred_check
      _
    $region15: #{tpu_custom_call.1} parent=1 // pred_check_branch
      %2722 = sbr.rel (0) target = $region17
    $region16: #{tpu_custom_call.1} parent=1 // pred_region
      %2723 = dma.done [#allocation4], 32768
    $region17: #{tpu_custom_call.1} parent=1 // pred_fallthru
      _
    %2724 = vsyncpa [#allocation3], 1
    %2725 = vsyncpa [#allocation4], 1

</llo_original>
